<compile_context>
chip_gen: v7x
topology: tpu7x:2x2x1
jax: 0.10.0
libtpu: 0.0.40
codegen_flags: <defaults>
</compile_context>

<pallas_src>
import jax
import jax.numpy as jnp
import numpy as np
from jax.experimental import pallas as pl
from jax.experimental.pallas import tpu as pltpu

INPUT_SIZE = 4
HIDDEN_SIZE = 64
NUM_LAYERS = 2  # kernel is specialized to 2 layers (module default)

# Gate orders: PyTorch packs LSTM weights as [i, f, g, o]; the fused kernel layout
# puts the three sigmoid gates first: blocks [I | F | O | G], each block 2H wide
# and split [layer0 | layer1].
_PACKED = {"i": 0, "f": 1, "g": 2, "o": 3}
_FUSED = {"i": 0, "f": 1, "o": 2, "g": 3}


# ---------------------------------------------------------------------------
# Pallas kernel: full forward pass (hidden=None path -> zero initial states)
# ---------------------------------------------------------------------------
def lstm_detector_kernel(x_ref, wx_ref, wh_ref, b_ref, wfc_ref, bfc_ref,
                         out_ref, hn_ref, cn_ref):
    B, HF = hn_ref.shape            # HF = 2*H = 128 (fused state width)
    H = HF // 2
    TB = x_ref.shape[0]
    T = TB // B

    wh = wh_ref[...]                # (2H, 8H) bf16  fused recurrent weight
    b_fused = b_ref[...]            # (1, 8H)  f32   fused bias (b0 | b1 per gate)

    # ---- bulk input projection (hoisted out of the recurrence) ----
    # rows are time-major: row t*B + b  ->  x[b, t, :]
    gx = jnp.dot(x_ref[...], wx_ref[...],
                 preferred_element_type=jnp.float32) + b_fused   # (T*B, 8H) f32

    lane = jax.lax.broadcasted_iota(jnp.int32, (B, HF), 1)
    layer0_sel = lane < H
    layer0_mask = layer0_sel.astype(jnp.float32)

    def nonlin(gates):
        # gates: (B, 8H) with 128-lane-aligned blocks [I | F | O | G]
        s = jax.nn.sigmoid(gates[:, : 3 * HF])     # one EUP launch for i, f, o
        g = jnp.tanh(gates[:, 3 * HF:])            # one EUP launch for g
        return s[:, :HF], s[:, HF:2 * HF], s[:, 2 * HF:3 * HF], g

    # ---- step 0: layer-0 only (recurrent term is zero -> no matmul at all) ----
    i, f, o, g = nonlin(gx[0:B, :])
    c = (i * g) * layer0_mask                      # zero the (spurious) layer-1 half
    h = (o * jnp.tanh(c)) * layer0_mask            # state = [h0_0 | 0], [c0_0 | 0]

    # ---- wavefront steps t = 1 .. T-1: layer-0 step t + layer-1 step t-1 ----
    # one (B, 2H) @ (2H, 8H) matmul per serial step
    for t in range(1, T):
        gates = jnp.dot(h.astype(wh.dtype), wh,
                        preferred_element_type=jnp.float32) + gx[t * B:(t + 1) * B, :]
        i, f, o, g = nonlin(gates)
        c = f * c + i * g                          # [c0_t | c1_{t-1}]
        h = o * jnp.tanh(c)                        # [h0_t | h1_{t-1}]

    # ---- final step: layer-1 step T-1 only (layer-0 half of update is discarded) ----
    gates = jnp.dot(h.astype(wh.dtype), wh,
                    preferred_element_type=jnp.float32) + b_fused
    i, f, o, g = nonlin(gates)
    c_last = f * c + i * g                         # [garbage | c1_{T-1}]
    h_last = o * jnp.tanh(c_last)                  # [garbage | h1_{T-1}]

    # ---- fc(out[:, -1, :]) + sigmoid as VPU mul + lane reduce (wfc is zero over
    # ---- the layer-0 half, so no slicing of h_last is needed) ----
    logits = jnp.sum(h_last * wfc_ref[...], axis=-1, keepdims=True) + bfc_ref[...]
    out_ref[...] = jax.nn.sigmoid(logits)

    # ---- final states, lane-dense (B, 2H) slabs: [h0_{T-1} | h1_{T-1}] ----
    hn_ref[...] = jnp.where(layer0_sel, h, h_last)
    cn_ref[...] = jnp.where(layer0_sel, c, c_last)


# ---------------------------------------------------------------------------
# Wrapper
# ---------------------------------------------------------------------------
def lstm_detector_forward(x, fused):
    B, T, I = x.shape
    HF = fused["wh"].shape[0]
    H = HF // 2

    # time-major 2D view so the bulk input projection is a single matmul in-kernel
    x_tb = jnp.transpose(x, (1, 0, 2)).reshape(T * B, I).astype(jnp.bfloat16)

    vmem = pl.BlockSpec(memory_space=pltpu.MemorySpace.VMEM)
    out_shapes = (
        jax.ShapeDtypeStruct((B, 1), jnp.float32),    # sigmoid(fc(last h))
        jax.ShapeDtypeStruct((B, HF), jnp.float32),   # hn slab [h0 | h1]
        jax.ShapeDtypeStruct((B, HF), jnp.float32),   # cn slab [c0 | c1]
    )
    out, hn_slab, cn_slab = pl.pallas_call(
        lstm_detector_kernel,
        out_shape=out_shapes,
        in_specs=[vmem] * 6,
        out_specs=(vmem, vmem, vmem),
    )(x_tb, fused["wx"], fused["wh"], fused["b"], fused["wfc"], fused["bfc"])

    hn = jnp.stack([hn_slab[:, :H], hn_slab[:, H:]], axis=0)   # (num_layers, B, H)
    cn = jnp.stack([cn_slab[:, :H], cn_slab[:, H:]], axis=0)
    return out, (hn, cn)


# ---------------------------------------------------------------------------
# Parameter init (PyTorch-style U(-1/sqrt(H), 1/sqrt(H)), packed [i,f,g,o])
# ---------------------------------------------------------------------------
def init_params(key, input_size=INPUT_SIZE, hidden_size=HIDDEN_SIZE):
    H = hidden_size
    k = 1.0 / np.sqrt(H)
    ks = jax.random.split(key, 10)

    def u(kk, shape):
        return jax.random.uniform(kk, shape, jnp.float32, minval=-k, maxval=k)

    return {
        # layer 0: W_ih (I, 4H), W_hh (H, 4H), combined bias b_ih + b_hh (1, 4H)
        "wih0": u(ks[0], (input_size, 4 * H)),
        "whh0": u(ks[1], (H, 4 * H)),
        "b0":   u(ks[2], (1, 4 * H)) + u(ks[3], (1, 4 * H)),
        # layer 1
        "wih1": u(ks[4], (H, 4 * H)),
        "whh1": u(ks[5], (H, 4 * H)),
        "b1":   u(ks[6], (1, 4 * H)) + u(ks[7], (1, 4 * H)),
        # fc: (H, 1) weight (pre-transposed), (1, 1) bias
        "wfc":  u(ks[8], (H, 1)),
        "bfc":  u(ks[9], (1, 1)),
    }


# ---------------------------------------------------------------------------
# One-time weight prep: scatter packed [i,f,g,o] per-layer weights into the
# fused [I|F|O|G] x [layer0|layer1] layout used by the kernel.
# ---------------------------------------------------------------------------
def _scatter_gates(dst, src, layer, H):
    HF = 2 * H
    for gate in "ifgo":
        ps = _PACKED[gate] * H
        fs = _FUSED[gate] * HF + layer * H
        dst = dst.at[:, fs:fs + H].set(src[:, ps:ps + H])
    return dst


def prep_fused_params(p):
    H = p["whh0"].shape[0]
    HF = 2 * H
    I = p["wih0"].shape[0]

    # input-projection weight: only layer-0 columns are nonzero
    wx = _scatter_gates(jnp.zeros((I, 4 * HF), jnp.float32), p["wih0"], 0, H)

    # fused recurrent weight: rows 0:H take h0 (-> whh0 for layer 0, wih1 for layer 1),
    # rows H:2H take h1 (-> whh1 for layer 1, zeros for layer 0)
    top = _scatter_gates(jnp.zeros((H, 4 * HF), jnp.float32), p["whh0"], 0, H)
    top = _scatter_gates(top, p["wih1"], 1, H)
    bot = _scatter_gates(jnp.zeros((H, 4 * HF), jnp.float32), p["whh1"], 1, H)
    wh = jnp.concatenate([top, bot], axis=0)

    b = _scatter_gates(jnp.zeros((1, 4 * HF), jnp.float32), p["b0"], 0, H)
    b = _scatter_gates(b, p["b1"], 1, H)

    wfc = jnp.zeros((1, HF), jnp.float32).at[0, H:].set(p["wfc"][:, 0])

    return {
        "wx": wx.astype(jnp.bfloat16),   # MXU operands in bf16 (v6e/v7x native)
        "wh": wh.astype(jnp.bfloat16),
        "b": b,                          # bias / VPU-side tensors stay f32
        "wfc": wfc,
        "bfc": p["bfc"],
    }


# ---------------------------------------------------------------------------
# Pure-JAX f32 reference (PyTorch LSTM cell semantics) for a sanity check
# ---------------------------------------------------------------------------
def ref_forward(x, p):
    B, T, _ = x.shape
    H = p["whh0"].shape[0]

    def cell(xt, h, c, wih, whh, b):
        g = xt @ wih + h @ whh + b
        i = jax.nn.sigmoid(g[:, 0 * H:1 * H])
        f = jax.nn.sigmoid(g[:, 1 * H:2 * H])
        gg = jnp.tanh(g[:, 2 * H:3 * H])
        o = jax.nn.sigmoid(g[:, 3 * H:4 * H])
        c = f * c + i * gg
        h = o * jnp.tanh(c)
        return h, c

    h0 = jnp.zeros((B, H)); c0 = jnp.zeros((B, H))
    hs = []
    for t in range(T):
        h0, c0 = cell(x[:, t, :], h0, c0, p["wih0"], p["whh0"], p["b0"])
        hs.append(h0)
    h1 = jnp.zeros((B, H)); c1 = jnp.zeros((B, H))
    for t in range(T):
        h1, c1 = cell(hs[t], h1, c1, p["wih1"], p["whh1"], p["b1"])
    out = jax.nn.sigmoid(h1 @ p["wfc"] + p["bfc"])
    return out, jnp.stack([h0, h1]), jnp.stack([c0, c1])


if __name__ == "__main__":
    key = jax.random.PRNGKey(0)
    k_x, k_p = jax.random.split(key)

    B, T = 2, 8  # batch=2, sequence length=8, feature dim = input_size=4
    x = jax.random.normal(k_x, (B, T, INPUT_SIZE), dtype=jnp.float32)
    params = init_params(k_p)
    fused = prep_fused_params(params)

    out, (hn, cn) = lstm_detector_forward(x, fused)
    jax.block_until_ready((out, hn, cn))

    # sanity check against plain-JAX f32 reference (kernel uses bf16 MXU operands,
    # so the tolerance is loosened accordingly)
    r_out, r_hn, r_cn = ref_forward(x, params)
    np.testing.assert_allclose(np.asarray(out), np.asarray(r_out), atol=3e-2, rtol=3e-2)
    np.testing.assert_allclose(np.asarray(hn), np.asarray(r_hn), atol=3e-2, rtol=3e-2)
    np.testing.assert_allclose(np.asarray(cn), np.asarray(r_cn), atol=3e-2, rtol=3e-2)

    print("KERNEL_OK")
</pallas_src>

<mosaic_0001>
module attributes {stable_mosaic.version = 11 : i64} {
  func.func @lstm_detector_kernel(%arg0: memref<16x4xbf16, #tpu.memory_space<vmem>>, %arg1: memref<4x512xbf16, #tpu.memory_space<vmem>>, %arg2: memref<128x512xbf16, #tpu.memory_space<vmem>>, %arg3: memref<1x512xf32, #tpu.memory_space<vmem>>, %arg4: memref<1x128xf32, #tpu.memory_space<vmem>>, %arg5: memref<1x1xf32, #tpu.memory_space<vmem>>, %arg6: memref<2x1xf32, #tpu.memory_space<vmem>>, %arg7: memref<2x128xf32, #tpu.memory_space<vmem>>, %arg8: memref<2x128xf32, #tpu.memory_space<vmem>>) attributes {dimension_semantics = [], scalar_prefetch = 0 : i64, scratch_operands = 0 : i64, tpu.core_type = #tpu.core_type<tc>} {
    %c0 = arith.constant 0 : index
    %c0_0 = arith.constant 0 : index
    %0 = vector.load %arg2[%c0, %c0_0] : memref<128x512xbf16, #tpu.memory_space<vmem>>, vector<128x512xbf16>
    %c0_1 = arith.constant 0 : index
    %c0_2 = arith.constant 0 : index
    %1 = vector.load %arg3[%c0_1, %c0_2] : memref<1x512xf32, #tpu.memory_space<vmem>>, vector<1x512xf32>
    %c0_3 = arith.constant 0 : index
    %c0_4 = arith.constant 0 : index
    %2 = vector.load %arg0[%c0_3, %c0_4] : memref<16x4xbf16, #tpu.memory_space<vmem>>, vector<16x4xbf16>
    %c0_5 = arith.constant 0 : index
    %c0_6 = arith.constant 0 : index
    %3 = vector.load %arg1[%c0_5, %c0_6] : memref<4x512xbf16, #tpu.memory_space<vmem>>, vector<4x512xbf16>
    %cst = arith.constant dense<0.000000e+00> : vector<16x512xf32>
    %4 = tpu.matmul %2, %3, %cst {dimension_numbers = #tpu.dot_dimension_numbers<[1], [0], [0], [1], [0, 0, 1, 1], [], []>} : vector<16x4xbf16>, vector<4x512xbf16>, vector<16x512xf32> -> vector<16x512xf32>
    %5 = vector.broadcast %1 : vector<1x512xf32> to vector<16x512xf32>
    %6 = arith.addf %4, %5 : vector<16x512xf32>
    %7 = tpu.iota {dimensions = array<i32: 1>} : vector<2x128xi32>
    %c64_i32 = arith.constant 64 : i32
    %8 = vector.broadcast %c64_i32 : i32 to vector<2x128xi32>
    %9 = arith.cmpi slt, %7, %8 : vector<2x128xi32>
    %10 = arith.extui %9 : vector<2x128xi1> to vector<2x128xi32>
    %11 = arith.sitofp %10 : vector<2x128xi32> to vector<2x128xf32>
    %12 = vector.extract_strided_slice %6 {offsets = [0, 0], sizes = [2, 512], strides = [1, 1]} : vector<16x512xf32> to vector<2x512xf32>
    %13 = vector.extract_strided_slice %12 {offsets = [0, 0], sizes = [2, 384], strides = [1, 1]} : vector<2x512xf32> to vector<2x384xf32>
    %14 = arith.negf %13 : vector<2x384xf32>
    %15 = math.exp %14 : vector<2x384xf32>
    %cst_7 = arith.constant 1.000000e+00 : f32
    %16 = vector.broadcast %cst_7 : f32 to vector<2x384xf32>
    %17 = arith.addf %16, %15 : vector<2x384xf32>
    %18 = arith.divf %16, %17 : vector<2x384xf32>
    %19 = vector.extract_strided_slice %12 {offsets = [0, 384], sizes = [2, 128], strides = [1, 1]} : vector<2x512xf32> to vector<2x128xf32>
    %20 = math.tanh %19 : vector<2x128xf32>
    %21 = vector.extract_strided_slice %18 {offsets = [0, 0], sizes = [2, 128], strides = [1, 1]} : vector<2x384xf32> to vector<2x128xf32>
    %22 = vector.extract_strided_slice %18 {offsets = [0, 256], sizes = [2, 128], strides = [1, 1]} : vector<2x384xf32> to vector<2x128xf32>
    %23 = arith.mulf %21, %20 : vector<2x128xf32>
    %24 = arith.mulf %23, %11 : vector<2x128xf32>
    %25 = math.tanh %24 : vector<2x128xf32>
    %26 = arith.mulf %22, %25 : vector<2x128xf32>
    %27 = arith.mulf %26, %11 : vector<2x128xf32>
    %28 = arith.truncf %27 : vector<2x128xf32> to vector<2x128xbf16>
    %cst_8 = arith.constant dense<0.000000e+00> : vector<2x512xf32>
    %29 = tpu.matmul %28, %0, %cst_8 {dimension_numbers = #tpu.dot_dimension_numbers<[1], [0], [0], [1], [0, 0, 1, 1], [], []>} : vector<2x128xbf16>, vector<128x512xbf16>, vector<2x512xf32> -> vector<2x512xf32>
    %30 = vector.extract_strided_slice %6 {offsets = [2, 0], sizes = [2, 512], strides = [1, 1]} : vector<16x512xf32> to vector<2x512xf32>
    %31 = arith.addf %29, %30 : vector<2x512xf32>
    %32 = vector.extract_strided_slice %31 {offsets = [0, 0], sizes = [2, 384], strides = [1, 1]} : vector<2x512xf32> to vector<2x384xf32>
    %33 = arith.negf %32 : vector<2x384xf32>
    %34 = math.exp %33 : vector<2x384xf32>
    %cst_9 = arith.constant 1.000000e+00 : f32
    %35 = vector.broadcast %cst_9 : f32 to vector<2x384xf32>
    %36 = arith.addf %35, %34 : vector<2x384xf32>
    %37 = arith.divf %35, %36 : vector<2x384xf32>
    %38 = vector.extract_strided_slice %31 {offsets = [0, 384], sizes = [2, 128], strides = [1, 1]} : vector<2x512xf32> to vector<2x128xf32>
    %39 = math.tanh %38 : vector<2x128xf32>
    %40 = vector.extract_strided_slice %37 {offsets = [0, 0], sizes = [2, 128], strides = [1, 1]} : vector<2x384xf32> to vector<2x128xf32>
    %41 = vector.extract_strided_slice %37 {offsets = [0, 128], sizes = [2, 128], strides = [1, 1]} : vector<2x384xf32> to vector<2x128xf32>
    %42 = vector.extract_strided_slice %37 {offsets = [0, 256], sizes = [2, 128], strides = [1, 1]} : vector<2x384xf32> to vector<2x128xf32>
    %43 = arith.mulf %41, %24 : vector<2x128xf32>
    %44 = arith.mulf %40, %39 : vector<2x128xf32>
    %45 = arith.addf %43, %44 : vector<2x128xf32>
    %46 = math.tanh %45 : vector<2x128xf32>
    %47 = arith.mulf %42, %46 : vector<2x128xf32>
    %48 = arith.truncf %47 : vector<2x128xf32> to vector<2x128xbf16>
    %cst_10 = arith.constant dense<0.000000e+00> : vector<2x512xf32>
    %49 = tpu.matmul %48, %0, %cst_10 {dimension_numbers = #tpu.dot_dimension_numbers<[1], [0], [0], [1], [0, 0, 1, 1], [], []>} : vector<2x128xbf16>, vector<128x512xbf16>, vector<2x512xf32> -> vector<2x512xf32>
    %50 = vector.extract_strided_slice %6 {offsets = [4, 0], sizes = [2, 512], strides = [1, 1]} : vector<16x512xf32> to vector<2x512xf32>
    %51 = arith.addf %49, %50 : vector<2x512xf32>
    %52 = vector.extract_strided_slice %51 {offsets = [0, 0], sizes = [2, 384], strides = [1, 1]} : vector<2x512xf32> to vector<2x384xf32>
    %53 = arith.negf %52 : vector<2x384xf32>
    %54 = math.exp %53 : vector<2x384xf32>
    %cst_11 = arith.constant 1.000000e+00 : f32
    %55 = vector.broadcast %cst_11 : f32 to vector<2x384xf32>
    %56 = arith.addf %55, %54 : vector<2x384xf32>
    %57 = arith.divf %55, %56 : vector<2x384xf32>
    %58 = vector.extract_strided_slice %51 {offsets = [0, 384], sizes = [2, 128], strides = [1, 1]} : vector<2x512xf32> to vector<2x128xf32>
    %59 = math.tanh %58 : vector<2x128xf32>
    %60 = vector.extract_strided_slice %57 {offsets = [0, 0], sizes = [2, 128], strides = [1, 1]} : vector<2x384xf32> to vector<2x128xf32>
    %61 = vector.extract_strided_slice %57 {offsets = [0, 128], sizes = [2, 128], strides = [1, 1]} : vector<2x384xf32> to vector<2x128xf32>
    %62 = vector.extract_strided_slice %57 {offsets = [0, 256], sizes = [2, 128], strides = [1, 1]} : vector<2x384xf32> to vector<2x128xf32>
    %63 = arith.mulf %61, %45 : vector<2x128xf32>
    %64 = arith.mulf %60, %59 : vector<2x128xf32>
    %65 = arith.addf %63, %64 : vector<2x128xf32>
    %66 = math.tanh %65 : vector<2x128xf32>
    %67 = arith.mulf %62, %66 : vector<2x128xf32>
    %68 = arith.truncf %67 : vector<2x128xf32> to vector<2x128xbf16>
    %cst_12 = arith.constant dense<0.000000e+00> : vector<2x512xf32>
    %69 = tpu.matmul %68, %0, %cst_12 {dimension_numbers = #tpu.dot_dimension_numbers<[1], [0], [0], [1], [0, 0, 1, 1], [], []>} : vector<2x128xbf16>, vector<128x512xbf16>, vector<2x512xf32> -> vector<2x512xf32>
    %70 = vector.extract_strided_slice %6 {offsets = [6, 0], sizes = [2, 512], strides = [1, 1]} : vector<16x512xf32> to vector<2x512xf32>
    %71 = arith.addf %69, %70 : vector<2x512xf32>
    %72 = vector.extract_strided_slice %71 {offsets = [0, 0], sizes = [2, 384], strides = [1, 1]} : vector<2x512xf32> to vector<2x384xf32>
    %73 = arith.negf %72 : vector<2x384xf32>
    %74 = math.exp %73 : vector<2x384xf32>
    %cst_13 = arith.constant 1.000000e+00 : f32
    %75 = vector.broadcast %cst_13 : f32 to vector<2x384xf32>
    %76 = arith.addf %75, %74 : vector<2x384xf32>
    %77 = arith.divf %75, %76 : vector<2x384xf32>
    %78 = vector.extract_strided_slice %71 {offsets = [0, 384], sizes = [2, 128], strides = [1, 1]} : vector<2x512xf32> to vector<2x128xf32>
    %79 = math.tanh %78 : vector<2x128xf32>
    %80 = vector.extract_strided_slice %77 {offsets = [0, 0], sizes = [2, 128], strides = [1, 1]} : vector<2x384xf32> to vector<2x128xf32>
    %81 = vector.extract_strided_slice %77 {offsets = [0, 128], sizes = [2, 128], strides = [1, 1]} : vector<2x384xf32> to vector<2x128xf32>
    %82 = vector.extract_strided_slice %77 {offsets = [0, 256], sizes = [2, 128], strides = [1, 1]} : vector<2x384xf32> to vector<2x128xf32>
    %83 = arith.mulf %81, %65 : vector<2x128xf32>
    %84 = arith.mulf %80, %79 : vector<2x128xf32>
    %85 = arith.addf %83, %84 : vector<2x128xf32>
    %86 = math.tanh %85 : vector<2x128xf32>
    %87 = arith.mulf %82, %86 : vector<2x128xf32>
    %88 = arith.truncf %87 : vector<2x128xf32> to vector<2x128xbf16>
    %cst_14 = arith.constant dense<0.000000e+00> : vector<2x512xf32>
    %89 = tpu.matmul %88, %0, %cst_14 {dimension_numbers = #tpu.dot_dimension_numbers<[1], [0], [0], [1], [0, 0, 1, 1], [], []>} : vector<2x128xbf16>, vector<128x512xbf16>, vector<2x512xf32> -> vector<2x512xf32>
    %90 = vector.extract_strided_slice %6 {offsets = [8, 0], sizes = [2, 512], strides = [1, 1]} : vector<16x512xf32> to vector<2x512xf32>
    %91 = arith.addf %89, %90 : vector<2x512xf32>
    %92 = vector.extract_strided_slice %91 {offsets = [0, 0], sizes = [2, 384], strides = [1, 1]} : vector<2x512xf32> to vector<2x384xf32>
    %93 = arith.negf %92 : vector<2x384xf32>
    %94 = math.exp %93 : vector<2x384xf32>
    %cst_15 = arith.constant 1.000000e+00 : f32
    %95 = vector.broadcast %cst_15 : f32 to vector<2x384xf32>
    %96 = arith.addf %95, %94 : vector<2x384xf32>
    %97 = arith.divf %95, %96 : vector<2x384xf32>
    %98 = vector.extract_strided_slice %91 {offsets = [0, 384], sizes = [2, 128], strides = [1, 1]} : vector<2x512xf32> to vector<2x128xf32>
    %99 = math.tanh %98 : vector<2x128xf32>
    %100 = vector.extract_strided_slice %97 {offsets = [0, 0], sizes = [2, 128], strides = [1, 1]} : vector<2x384xf32> to vector<2x128xf32>
    %101 = vector.extract_strided_slice %97 {offsets = [0, 128], sizes = [2, 128], strides = [1, 1]} : vector<2x384xf32> to vector<2x128xf32>
    %102 = vector.extract_strided_slice %97 {offsets = [0, 256], sizes = [2, 128], strides = [1, 1]} : vector<2x384xf32> to vector<2x128xf32>
    %103 = arith.mulf %101, %85 : vector<2x128xf32>
    %104 = arith.mulf %100, %99 : vector<2x128xf32>
    %105 = arith.addf %103, %104 : vector<2x128xf32>
    %106 = math.tanh %105 : vector<2x128xf32>
    %107 = arith.mulf %102, %106 : vector<2x128xf32>
    %108 = arith.truncf %107 : vector<2x128xf32> to vector<2x128xbf16>
    %cst_16 = arith.constant dense<0.000000e+00> : vector<2x512xf32>
    %109 = tpu.matmul %108, %0, %cst_16 {dimension_numbers = #tpu.dot_dimension_numbers<[1], [0], [0], [1], [0, 0, 1, 1], [], []>} : vector<2x128xbf16>, vector<128x512xbf16>, vector<2x512xf32> -> vector<2x512xf32>
    %110 = vector.extract_strided_slice %6 {offsets = [10, 0], sizes = [2, 512], strides = [1, 1]} : vector<16x512xf32> to vector<2x512xf32>
    %111 = arith.addf %109, %110 : vector<2x512xf32>
    %112 = vector.extract_strided_slice %111 {offsets = [0, 0], sizes = [2, 384], strides = [1, 1]} : vector<2x512xf32> to vector<2x384xf32>
    %113 = arith.negf %112 : vector<2x384xf32>
    %114 = math.exp %113 : vector<2x384xf32>
    %cst_17 = arith.constant 1.000000e+00 : f32
    %115 = vector.broadcast %cst_17 : f32 to vector<2x384xf32>
    %116 = arith.addf %115, %114 : vector<2x384xf32>
    %117 = arith.divf %115, %116 : vector<2x384xf32>
    %118 = vector.extract_strided_slice %111 {offsets = [0, 384], sizes = [2, 128], strides = [1, 1]} : vector<2x512xf32> to vector<2x128xf32>
    %119 = math.tanh %118 : vector<2x128xf32>
    %120 = vector.extract_strided_slice %117 {offsets = [0, 0], sizes = [2, 128], strides = [1, 1]} : vector<2x384xf32> to vector<2x128xf32>
    %121 = vector.extract_strided_slice %117 {offsets = [0, 128], sizes = [2, 128], strides = [1, 1]} : vector<2x384xf32> to vector<2x128xf32>
    %122 = vector.extract_strided_slice %117 {offsets = [0, 256], sizes = [2, 128], strides = [1, 1]} : vector<2x384xf32> to vector<2x128xf32>
    %123 = arith.mulf %121, %105 : vector<2x128xf32>
    %124 = arith.mulf %120, %119 : vector<2x128xf32>
    %125 = arith.addf %123, %124 : vector<2x128xf32>
    %126 = math.tanh %125 : vector<2x128xf32>
    %127 = arith.mulf %122, %126 : vector<2x128xf32>
    %128 = arith.truncf %127 : vector<2x128xf32> to vector<2x128xbf16>
    %cst_18 = arith.constant dense<0.000000e+00> : vector<2x512xf32>
    %129 = tpu.matmul %128, %0, %cst_18 {dimension_numbers = #tpu.dot_dimension_numbers<[1], [0], [0], [1], [0, 0, 1, 1], [], []>} : vector<2x128xbf16>, vector<128x512xbf16>, vector<2x512xf32> -> vector<2x512xf32>
    %130 = vector.extract_strided_slice %6 {offsets = [12, 0], sizes = [2, 512], strides = [1, 1]} : vector<16x512xf32> to vector<2x512xf32>
    %131 = arith.addf %129, %130 : vector<2x512xf32>
    %132 = vector.extract_strided_slice %131 {offsets = [0, 0], sizes = [2, 384], strides = [1, 1]} : vector<2x512xf32> to vector<2x384xf32>
    %133 = arith.negf %132 : vector<2x384xf32>
    %134 = math.exp %133 : vector<2x384xf32>
    %cst_19 = arith.constant 1.000000e+00 : f32
    %135 = vector.broadcast %cst_19 : f32 to vector<2x384xf32>
    %136 = arith.addf %135, %134 : vector<2x384xf32>
    %137 = arith.divf %135, %136 : vector<2x384xf32>
    %138 = vector.extract_strided_slice %131 {offsets = [0, 384], sizes = [2, 128], strides = [1, 1]} : vector<2x512xf32> to vector<2x128xf32>
    %139 = math.tanh %138 : vector<2x128xf32>
    %140 = vector.extract_strided_slice %137 {offsets = [0, 0], sizes = [2, 128], strides = [1, 1]} : vector<2x384xf32> to vector<2x128xf32>
    %141 = vector.extract_strided_slice %137 {offsets = [0, 128], sizes = [2, 128], strides = [1, 1]} : vector<2x384xf32> to vector<2x128xf32>
    %142 = vector.extract_strided_slice %137 {offsets = [0, 256], sizes = [2, 128], strides = [1, 1]} : vector<2x384xf32> to vector<2x128xf32>
    %143 = arith.mulf %141, %125 : vector<2x128xf32>
    %144 = arith.mulf %140, %139 : vector<2x128xf32>
    %145 = arith.addf %143, %144 : vector<2x128xf32>
    %146 = math.tanh %145 : vector<2x128xf32>
    %147 = arith.mulf %142, %146 : vector<2x128xf32>
    %148 = arith.truncf %147 : vector<2x128xf32> to vector<2x128xbf16>
    %cst_20 = arith.constant dense<0.000000e+00> : vector<2x512xf32>
    %149 = tpu.matmul %148, %0, %cst_20 {dimension_numbers = #tpu.dot_dimension_numbers<[1], [0], [0], [1], [0, 0, 1, 1], [], []>} : vector<2x128xbf16>, vector<128x512xbf16>, vector<2x512xf32> -> vector<2x512xf32>
    %150 = vector.extract_strided_slice %6 {offsets = [14, 0], sizes = [2, 512], strides = [1, 1]} : vector<16x512xf32> to vector<2x512xf32>
    %151 = arith.addf %149, %150 : vector<2x512xf32>
    %152 = vector.extract_strided_slice %151 {offsets = [0, 0], sizes = [2, 384], strides = [1, 1]} : vector<2x512xf32> to vector<2x384xf32>
    %153 = arith.negf %152 : vector<2x384xf32>
    %154 = math.exp %153 : vector<2x384xf32>
    %cst_21 = arith.constant 1.000000e+00 : f32
    %155 = vector.broadcast %cst_21 : f32 to vector<2x384xf32>
    %156 = arith.addf %155, %154 : vector<2x384xf32>
    %157 = arith.divf %155, %156 : vector<2x384xf32>
    %158 = vector.extract_strided_slice %151 {offsets = [0, 384], sizes = [2, 128], strides = [1, 1]} : vector<2x512xf32> to vector<2x128xf32>
    %159 = math.tanh %158 : vector<2x128xf32>
    %160 = vector.extract_strided_slice %157 {offsets = [0, 0], sizes = [2, 128], strides = [1, 1]} : vector<2x384xf32> to vector<2x128xf32>
    %161 = vector.extract_strided_slice %157 {offsets = [0, 128], sizes = [2, 128], strides = [1, 1]} : vector<2x384xf32> to vector<2x128xf32>
    %162 = vector.extract_strided_slice %157 {offsets = [0, 256], sizes = [2, 128], strides = [1, 1]} : vector<2x384xf32> to vector<2x128xf32>
    %163 = arith.mulf %161, %145 : vector<2x128xf32>
    %164 = arith.mulf %160, %159 : vector<2x128xf32>
    %165 = arith.addf %163, %164 : vector<2x128xf32>
    %166 = math.tanh %165 : vector<2x128xf32>
    %167 = arith.mulf %162, %166 : vector<2x128xf32>
    %168 = arith.truncf %167 : vector<2x128xf32> to vector<2x128xbf16>
    %cst_22 = arith.constant dense<0.000000e+00> : vector<2x512xf32>
    %169 = tpu.matmul %168, %0, %cst_22 {dimension_numbers = #tpu.dot_dimension_numbers<[1], [0], [0], [1], [0, 0, 1, 1], [], []>} : vector<2x128xbf16>, vector<128x512xbf16>, vector<2x512xf32> -> vector<2x512xf32>
    %170 = vector.broadcast %1 : vector<1x512xf32> to vector<2x512xf32>
    %171 = arith.addf %169, %170 : vector<2x512xf32>
    %172 = vector.extract_strided_slice %171 {offsets = [0, 0], sizes = [2, 384], strides = [1, 1]} : vector<2x512xf32> to vector<2x384xf32>
    %173 = arith.negf %172 : vector<2x384xf32>
    %174 = math.exp %173 : vector<2x384xf32>
    %cst_23 = arith.constant 1.000000e+00 : f32
    %175 = vector.broadcast %cst_23 : f32 to vector<2x384xf32>
    %176 = arith.addf %175, %174 : vector<2x384xf32>
    %177 = arith.divf %175, %176 : vector<2x384xf32>
    %178 = vector.extract_strided_slice %171 {offsets = [0, 384], sizes = [2, 128], strides = [1, 1]} : vector<2x512xf32> to vector<2x128xf32>
    %179 = math.tanh %178 : vector<2x128xf32>
    %180 = vector.extract_strided_slice %177 {offsets = [0, 0], sizes = [2, 128], strides = [1, 1]} : vector<2x384xf32> to vector<2x128xf32>
    %181 = vector.extract_strided_slice %177 {offsets = [0, 128], sizes = [2, 128], strides = [1, 1]} : vector<2x384xf32> to vector<2x128xf32>
    %182 = vector.extract_strided_slice %177 {offsets = [0, 256], sizes = [2, 128], strides = [1, 1]} : vector<2x384xf32> to vector<2x128xf32>
    %183 = arith.mulf %181, %165 : vector<2x128xf32>
    %184 = arith.mulf %180, %179 : vector<2x128xf32>
    %185 = arith.addf %183, %184 : vector<2x128xf32>
    %186 = math.tanh %185 : vector<2x128xf32>
    %187 = arith.mulf %182, %186 : vector<2x128xf32>
    %c0_24 = arith.constant 0 : index
    %c0_25 = arith.constant 0 : index
    %188 = vector.load %arg4[%c0_24, %c0_25] : memref<1x128xf32, #tpu.memory_space<vmem>>, vector<1x128xf32>
    %189 = vector.broadcast %188 : vector<1x128xf32> to vector<2x128xf32>
    %190 = arith.mulf %187, %189 : vector<2x128xf32>
    %cst_26 = arith.constant dense<0.000000e+00> : vector<2xf32>
    %191 = vector.multi_reduction <add>, %190, %cst_26 [1] : vector<2x128xf32> to vector<2xf32>
    %192 = vector.shape_cast %191 : vector<2xf32> to vector<2x1xf32>
    %c0_27 = arith.constant 0 : index
    %c0_28 = arith.constant 0 : index
    %193 = vector.load %arg5[%c0_27, %c0_28] : memref<1x1xf32, #tpu.memory_space<vmem>>, vector<1x1xf32>
    %194 = vector.broadcast %193 : vector<1x1xf32> to vector<2x1xf32>
    %195 = arith.addf %192, %194 : vector<2x1xf32>
    %196 = arith.negf %195 : vector<2x1xf32>
    %197 = math.exp %196 : vector<2x1xf32>
    %cst_29 = arith.constant 1.000000e+00 : f32
    %198 = vector.broadcast %cst_29 : f32 to vector<2x1xf32>
    %199 = arith.addf %198, %197 : vector<2x1xf32>
    %200 = arith.divf %198, %199 : vector<2x1xf32>
    %c0_30 = arith.constant 0 : index
    %c0_31 = arith.constant 0 : index
    %201 = vector.load %arg6[%c0_30, %c0_31] : memref<2x1xf32, #tpu.memory_space<vmem>>, vector<2x1xf32>
    tpu.vector_store %arg6[%c0_30, %c0_31], %200 {strides = array<i32>} : memref<2x1xf32, #tpu.memory_space<vmem>>, vector<2x1xf32>,
    %202 = arith.select %9, %167, %187 : vector<2x128xi1>, vector<2x128xf32>
    %c0_32 = arith.constant 0 : index
    %c0_33 = arith.constant 0 : index
    %203 = vector.load %arg7[%c0_32, %c0_33] : memref<2x128xf32, #tpu.memory_space<vmem>>, vector<2x128xf32>
    tpu.vector_store %arg7[%c0_32, %c0_33], %202 {strides = array<i32>} : memref<2x128xf32, #tpu.memory_space<vmem>>, vector<2x128xf32>,
    %204 = arith.select %9, %165, %185 : vector<2x128xi1>, vector<2x128xf32>
    %c0_34 = arith.constant 0 : index
    %c0_35 = arith.constant 0 : index
    %205 = vector.load %arg8[%c0_34, %c0_35] : memref<2x128xf32, #tpu.memory_space<vmem>>, vector<2x128xf32>
    tpu.vector_store %arg8[%c0_34, %c0_35], %204 {strides = array<i32>} : memref<2x128xf32, #tpu.memory_space<vmem>>, vector<2x128xf32>,
    return
  }
}

</mosaic_0001>

<llo_original>
// kernel: tpu_custom_call.1
$region0: #{tpu_custom_call.1}
  #allocation0 [shape = 'u32[]', space=smem, size = 0x4, offset = 0x4, fixed_abs, tag = 'smem constant byte address 0x4 - core index']
  #allocation1 [shape = 'u32[144,128]{1,0:T(1,128)}', space=vmem, size = 0x12000, scoped, tag = 'internal scratch']
  #allocation2 [shape = 'f32[1,1]{1,0:T(1,128)S(1)}', space=vmem, size = 0x200, scoped, tag = 'scoped memory for tpu_custom_call.1']
  %s0 = inlined_call_operand.vmem [shape: bf16[16,4], index: 0, kind: input, shape index: {}]
  %s1 = inlined_call_operand.vmem [shape: bf16[4,512], index: 1, kind: input, shape index: {}]
  %s2 = inlined_call_operand.hbm [shape: bf16[128,512], index: 2, kind: input, shape index: {}]
  %s3 = inlined_call_operand.vmem [shape: f32[1,512], index: 3, kind: input, shape index: {}]
  %s4 = inlined_call_operand.vmem [shape: f32[1,128], index: 4, kind: input, shape index: {}]
  %s5 = inlined_call_operand.<no memory space> [shape: f32[1,1], index: 5, kind: input, shape index: {}]
  %s6 = inlined_call_operand.vmem [shape: f32[2,1], index: 6, kind: output, shape index: {0}]
  %s7 = inlined_call_operand.hbm [shape: f32[2,128], index: 7, kind: output, shape index: {1}]
  %s8 = inlined_call_operand.hbm [shape: f32[2,128], index: 8, kind: output, shape index: {2}]
  %9 = xla_tuple %s6, %s7, %s8
  %s10 = sld [smem:[#allocation0]]
  $region54: #{tpu_custom_call.1} parent=0
    _
  %s12 = ssub.s32 1, %s10
  %s13 = scalar_select 0, %s12, %s10
  %v14 = vstv %s5
  %15 = vst [vmem:[#allocation2] sm:$0x1] %v14
  $region1: #{tpu_custom_call.1} parent=0
    #allocation3 [shape = 'u8[131072]{0}', space=vmem, size = 0x20000, scoped, tag = 'input window, operand 2, single buffered']
    #allocation4 [shape = 's32[1]{0}', space=sflag, size = 0x4, scoped, tag = 'scoped memory for tpu_custom_call.1']
    #allocation5 [shape = 's32[1]{0}', space=sflag, size = 0x4, scoped, tag = 'scoped memory for tpu_custom_call.1']
    #allocation6 [shape = 'u8[1024]{0}', space=vmem, size = 0x400, scoped, tag = 'output window, operand 1, single buffered']
    #allocation7 [shape = 'u8[1024]{0}', space=vmem, size = 0x400, scoped, tag = 'output window, operand 2, single buffered']
    #allocation8 [shape = 's32[1]{0}', space=sflag, size = 0x4, scoped, tag = 'scoped memory for tpu_custom_call.1']
    %16 = vsyncpa [#allocation4], 0
    %17 = vsyncpa [#allocation5], 0
    %18 = vsyncpa [#allocation8], 0
    // Predicated region
    $region2: #{tpu_custom_call.1} parent=1 // pred_check
      _
    $region3: #{tpu_custom_call.1} parent=1 // pred_check_branch
      %20 = sbr.rel (0) target = $region5
    $region4: #{tpu_custom_call.1} parent=1 // pred_region
      _
    $region5: #{tpu_custom_call.1} parent=1 // pred_fallthru
      _
    // Predicated region
    $region6: #{tpu_custom_call.1} parent=1 // pred_check
      _
    $region7: #{tpu_custom_call.1} parent=1 // pred_check_branch
      %22 = sbr.rel (0) target = $region9
    $region8: #{tpu_custom_call.1} parent=1 // pred_region
      _
    $region9: #{tpu_custom_call.1} parent=1 // pred_fallthru
      _
    // Predicated region
    $region10: #{tpu_custom_call.1} parent=1 // pred_check
      _
    $region11: #{tpu_custom_call.1} parent=1 // pred_check_branch
      %24 = sbr.rel (0) target = $region13
    $region12: #{tpu_custom_call.1} parent=1 // pred_region
      %s26 = ssub.s32 4096, 4096
      %27 = vsyncadd [#allocation4], %s26
      %s28 = sshll.u32 [#allocation3], 4
      %s29 = int_to_ptr.vmem [resolvable:$true] %s28
      %34 = dma.hbm_to_vmem [thread:$0]  %s2, 4096, %s29, [#allocation4], 256, 256, 16
    $region13: #{tpu_custom_call.1} parent=1 // pred_fallthru
      _
    // Predicated region
    $region14: #{tpu_custom_call.1} parent=1 // pred_check
      _
    $region15: #{tpu_custom_call.1} parent=1 // pred_check_branch
      %36 = sbr.rel (0) target = $region17
    $region16: #{tpu_custom_call.1} parent=1 // pred_region
      _
    $region17: #{tpu_custom_call.1} parent=1 // pred_fallthru
      _
    // Predicated region
    $region18: #{tpu_custom_call.1} parent=1 // pred_check
      _
    $region19: #{tpu_custom_call.1} parent=1 // pred_check_branch
      %38 = sbr.rel (0) target = $region21
    $region20: #{tpu_custom_call.1} parent=1 // pred_region
      _
    $region21: #{tpu_custom_call.1} parent=1 // pred_fallthru
      _
    // Predicated region
    $region22: #{tpu_custom_call.1} parent=1 // pred_check
      _
    $region23: #{tpu_custom_call.1} parent=1 // pred_check_branch
      %40 = sbr.rel (0) target = $region25
    $region24: #{tpu_custom_call.1} parent=1 // pred_region
      _
    $region25: #{tpu_custom_call.1} parent=1 // pred_fallthru
      _
    // Predicated region
    $region26: #{tpu_custom_call.1} parent=1 // pred_check
      _
    $region27: #{tpu_custom_call.1} parent=1 // pred_check_branch
      %42 = sbr.rel (0) target = $region29
    $region28: #{tpu_custom_call.1} parent=1 // pred_region
      %43 = dma.done [#allocation4], 4096
    $region29: #{tpu_custom_call.1} parent=1 // pred_fallthru
      _
    %v45 = vld [vmem:[#allocation3] sm:$0xff]
    %v46 = vld [vmem:[#allocation3 + $0x8] sm:$0xff]
    %v47 = vld [vmem:[#allocation3 + $0x10] sm:$0xff]
    %v48 = vld [vmem:[#allocation3 + $0x18] sm:$0xff]
    %v49 = vld [vmem:[#allocation3 + $0x20] sm:$0xff]
    %v50 = vld [vmem:[#allocation3 + $0x28] sm:$0xff]
    %v51 = vld [vmem:[#allocation3 + $0x30] sm:$0xff]
    %v52 = vld [vmem:[#allocation3 + $0x38] sm:$0xff]
    %v53 = vld [vmem:[#allocation3 + $0x40] sm:$0xff]
    %v54 = vld [vmem:[#allocation3 + $0x48] sm:$0xff]
    %v55 = vld [vmem:[#allocation3 + $0x50] sm:$0xff]
    %v56 = vld [vmem:[#allocation3 + $0x58] sm:$0xff]
    %v57 = vld [vmem:[#allocation3 + $0x60] sm:$0xff]
    %v58 = vld [vmem:[#allocation3 + $0x68] sm:$0xff]
    %v59 = vld [vmem:[#allocation3 + $0x70] sm:$0xff]
    %v60 = vld [vmem:[#allocation3 + $0x78] sm:$0xff]
    %v61 = vld [vmem:[#allocation3 + $0x80] sm:$0xff]
    %v62 = vld [vmem:[#allocation3 + $0x88] sm:$0xff]
    %v63 = vld [vmem:[#allocation3 + $0x90] sm:$0xff]
    %v64 = vld [vmem:[#allocation3 + $0x98] sm:$0xff]
    %v65 = vld [vmem:[#allocation3 + $0xa0] sm:$0xff]
    %v66 = vld [vmem:[#allocation3 + $0xa8] sm:$0xff]
    %v67 = vld [vmem:[#allocation3 + $0xb0] sm:$0xff]
    %v68 = vld [vmem:[#allocation3 + $0xb8] sm:$0xff]
    %v69 = vld [vmem:[#allocation3 + $0xc0] sm:$0xff]
    %v70 = vld [vmem:[#allocation3 + $0xc8] sm:$0xff]
    %v71 = vld [vmem:[#allocation3 + $0xd0] sm:$0xff]
    %v72 = vld [vmem:[#allocation3 + $0xd8] sm:$0xff]
    %v73 = vld [vmem:[#allocation3 + $0xe0] sm:$0xff]
    %v74 = vld [vmem:[#allocation3 + $0xe8] sm:$0xff]
    %v75 = vld [vmem:[#allocation3 + $0xf0] sm:$0xff]
    %v76 = vld [vmem:[#allocation3 + $0xf8] sm:$0xff]
    %v77 = vld [vmem:[%s3] sm:$0xf]
    %v78 = vld [vmem:[%s0] sm:$0xf]
    %v79 = vld [vmem:[%s0 + $0x4] sm:$0xf]
    %v80 = vld [vmem:[%s1] sm:$0xff]
    %v82 = vlaneseq
    %v83 = vshrl.u32 %v82, 7
    %v84 = vsub.s32 0, %v83
    %v85 = vrot.slane %v77, %v84
    %v86 = vlaneseq
    %v87 = vshrl.u32 %v86, 7
    %v88 = vsub.s32 1, %v87
    %v89 = vrot.slane %v77, %v88
    %v90 = vlaneseq
    %v91 = vshrl.u32 %v90, 7
    %v92 = vsub.s32 2, %v91
    %v93 = vrot.slane %v77, %v92
    %v94 = vlaneseq
    %v95 = vshrl.u32 %v94, 7
    %v96 = vsub.s32 3, %v95
    %v97 = vrot.slane %v77, %v96
    %v104 = vunpack.c.l.b16 %v78
    %v105 = vunpack.c.l.b16 %v79
    %v106 = vpack.c.b16 %v105, %v104
    %v108 = vcombine.high %v80, %v80
    %v110 = vunpack.c.l.s4 1983009808
    %v111 = vunpack.c.0.s8 %v110
    %v112 = vlaneseq
    %v113 = vshrl.u32 %v112, 7
    %v114 = vsub.s32 %v111, %v113
    %v115 = vrot.slane %v80, %v114
    %v117 = vunpack.c.l.s4 1983009808
    %v118 = vunpack.c.0.s8 %v117
    %v119 = vlaneseq
    %v120 = vshrl.u32 %v119, 7
    %v121 = vsub.s32 %v118, %v120
    %v122 = vrot.slane %v108, %v121
    %v123 = vcombine.high %v115, %v115
    %v124 = vcombine.high %v122, %v122
    %vm125 = vcmask 31744
    %v127 = vsel %vm125, %v106, 0
    %vm129 = vcmask 1041408
    %v131 = vsel %vm129, %v115, 0
    %v134 = vsel %vm129, %v123, 0
    %v137 = vsel %vm129, %v122, 0
    %v140 = vsel %vm129, %v124, 0
    %142 = vmatprep.subr.bf16.mxu0 %v134
    %143 = vmatpush1.bf16.msra.mxu0 %v131
    %144 = vmatprep.subr.bf16.mxu0 0
    %145 = vmatpush1.bf16.msra.mxu0 0
    %146 = vmatprep.subr.bf16.mxu0 0
    %147 = vmatpush1.bf16.msra.mxu0 0
    %148 = vmatprep.subr.bf16.mxu0 0
    %149 = vmatpush1.bf16.msra.mxu0 0
    %150 = vmatprep.subr.bf16.mxu0 0
    %151 = vmatpush1.bf16.msra.mxu0 0
    %152 = vmatprep.subr.bf16.mxu0 0
    %153 = vmatpush1.bf16.msra.mxu0 0
    %154 = vmatprep.subr.bf16.mxu0 0
    %155 = vmatpush1.bf16.msra.mxu0 0
    %156 = vmatprep.subr.bf16.mxu0 0
    %157 = vmatpush1.bf16.msra.mxu0 0
    %158 = vmatprep.subr.bf16.mxu0 0
    %159 = vmatpush1.bf16.msra.mxu0 0
    %160 = vmatprep.subr.bf16.mxu0 0
    %161 = vmatpush1.bf16.msra.mxu0 0
    %162 = vmatprep.subr.bf16.mxu0 0
    %163 = vmatpush1.bf16.msra.mxu0 0
    %164 = vmatprep.subr.bf16.mxu0 0
    %165 = vmatpush1.bf16.msra.mxu0 0
    %166 = vmatprep.subr.bf16.mxu0 0
    %167 = vmatpush1.bf16.msra.mxu0 0
    %168 = vmatprep.subr.bf16.mxu0 0
    %169 = vmatpush1.bf16.msra.mxu0 0
    %170 = vmatprep.subr.bf16.mxu0 0
    %171 = vmatpush1.bf16.msra.mxu0 0
    %172 = vmatprep.subr.bf16.mxu0 0
    %173 = vmatpush1.bf16.msra.mxu0 0
    %174 = vmatprep.mubr.bf16.mxu0 0
    %175 = vmatmul.mubr.bf16.gmra.mrb[0].mxu0 %v127
    %v176 = vpop.f32.mrb[0].mxu0
    %v177 = vadd.f32 %v85, %v176
    %v178 = vpop.f32.mrb[0].mxu0
    %v179 = vadd.f32 %v89, %v178
    %v180 = vpop.f32.mrb[0].mxu0
    %v181 = vadd.f32 %v85, %v180
    %v182 = vpop.f32.mrb[0].mxu0
    %v183 = vadd.f32 %v89, %v182
    %184 = vdwg.mxu0
    %185 = vmatprep.subr.bf16.mxu0 %v140
    %186 = vmatpush1.bf16.msra.mxu0 %v137
    %187 = vmatprep.subr.bf16.mxu0 0
    %188 = vmatpush1.bf16.msra.mxu0 0
    %189 = vmatprep.subr.bf16.mxu0 0
    %190 = vmatpush1.bf16.msra.mxu0 0
    %191 = vmatprep.subr.bf16.mxu0 0
    %192 = vmatpush1.bf16.msra.mxu0 0
    %193 = vmatprep.subr.bf16.mxu0 0
    %194 = vmatpush1.bf16.msra.mxu0 0
    %195 = vmatprep.subr.bf16.mxu0 0
    %196 = vmatpush1.bf16.msra.mxu0 0
    %197 = vmatprep.subr.bf16.mxu0 0
    %198 = vmatpush1.bf16.msra.mxu0 0
    %199 = vmatprep.subr.bf16.mxu0 0
    %200 = vmatpush1.bf16.msra.mxu0 0
    %201 = vmatprep.subr.bf16.mxu0 0
    %202 = vmatpush1.bf16.msra.mxu0 0
    %203 = vmatprep.subr.bf16.mxu0 0
    %204 = vmatpush1.bf16.msra.mxu0 0
    %205 = vmatprep.subr.bf16.mxu0 0
    %206 = vmatpush1.bf16.msra.mxu0 0
    %207 = vmatprep.subr.bf16.mxu0 0
    %208 = vmatpush1.bf16.msra.mxu0 0
    %209 = vmatprep.subr.bf16.mxu0 0
    %210 = vmatpush1.bf16.msra.mxu0 0
    %211 = vmatprep.subr.bf16.mxu0 0
    %212 = vmatpush1.bf16.msra.mxu0 0
    %213 = vmatprep.subr.bf16.mxu0 0
    %214 = vmatpush1.bf16.msra.mxu0 0
    %215 = vmatprep.subr.bf16.mxu0 0
    %216 = vmatpush1.bf16.msra.mxu0 0
    %217 = vmatprep.mubr.bf16.mxu0 0
    %218 = vmatmul.mubr.bf16.gmra.mrb[0].mxu0 %v127
    %v219 = vpop.f32.mrb[0].mxu0
    %v220 = vadd.f32 %v93, %v219
    %v221 = vpop.f32.mrb[0].mxu0
    %v222 = vadd.f32 %v97, %v221
    %v223 = vpop.f32.mrb[0].mxu0
    %v224 = vadd.f32 %v93, %v223
    %v225 = vpop.f32.mrb[0].mxu0
    %v226 = vadd.f32 %v97, %v225
    %227 = vdwg.mxu0
    %v228 = vlaneseq
    %v229 = vand.u32 %v228, 127
    %vm230 = vcmp.lt.s32.totalorder %v229, 64
    %v231 = vsel %vm230, 1, 0
    %v232 = vcvt.s32.f32 %v231
    %v233 = vxor.u32 %v177, 2147483648
    %v234 = vxor.u32 %v220, 2147483648
    %v235 = vmul.f32 %v233, 1.442695
    %v236 = vpow.pop %v235
    %v237 = vmul.f32 %v234, 1.442695
    %v238 = vpow.pop %v237
    %v239 = vadd.f32 %v236, 1.0
    %v240 = vadd.f32 %v238, 1.0
    %v241 = vrcp.pop %v239
    %v242 = vmul.f32 1.0, %v241
    %v243 = vrcp.pop %v240
    %v244 = vmul.f32 1.0, %v243
    %v245 = vtanh.pop %v222
    %v246 = vmul.f32 %v242, %v245
    %v247 = vmul.f32 %v246, %v232
    %v248 = vtanh.pop %v247
    %v249 = vmul.f32 %v244, %v248
    %v250 = vmul.f32 %v249, %v232
    %v251 = vpack.c.bf16 %v250, %v250
    %v284 = vunpack.c.l.b16 %v45
    %v285 = vunpack.c.h.b16 %v45
    %v286 = vunpack.c.l.b16 %v46
    %v287 = vunpack.c.h.b16 %v46
    %v288 = vunpack.c.l.b16 %v47
    %v289 = vunpack.c.h.b16 %v47
    %v290 = vunpack.c.l.b16 %v48
    %v291 = vunpack.c.h.b16 %v48
    %v292 = vunpack.c.l.b16 %v49
    %v293 = vunpack.c.h.b16 %v49
    %v294 = vunpack.c.l.b16 %v50
    %v295 = vunpack.c.h.b16 %v50
    %v296 = vunpack.c.l.b16 %v51
    %v297 = vunpack.c.h.b16 %v51
    %v298 = vunpack.c.l.b16 %v52
    %v299 = vunpack.c.h.b16 %v52
    %v300 = vunpack.c.l.b16 %v53
    %v301 = vunpack.c.h.b16 %v53
    %v302 = vunpack.c.l.b16 %v54
    %v303 = vunpack.c.h.b16 %v54
    %v304 = vunpack.c.l.b16 %v55
    %v305 = vunpack.c.h.b16 %v55
    %v306 = vunpack.c.l.b16 %v56
    %v307 = vunpack.c.h.b16 %v56
    %v308 = vunpack.c.l.b16 %v57
    %v309 = vunpack.c.h.b16 %v57
    %v310 = vunpack.c.l.b16 %v58
    %v311 = vunpack.c.h.b16 %v58
    %v312 = vunpack.c.l.b16 %v59
    %v313 = vunpack.c.h.b16 %v59
    %v314 = vunpack.c.l.b16 %v60
    %v315 = vunpack.c.h.b16 %v60
    %v316 = vunpack.c.l.b16 %v61
    %v317 = vunpack.c.h.b16 %v61
    %v318 = vunpack.c.l.b16 %v62
    %v319 = vunpack.c.h.b16 %v62
    %v320 = vunpack.c.l.b16 %v63
    %v321 = vunpack.c.h.b16 %v63
    %v322 = vunpack.c.l.b16 %v64
    %v323 = vunpack.c.h.b16 %v64
    %v324 = vunpack.c.l.b16 %v65
    %v325 = vunpack.c.h.b16 %v65
    %v326 = vunpack.c.l.b16 %v66
    %v327 = vunpack.c.h.b16 %v66
    %v328 = vunpack.c.l.b16 %v67
    %v329 = vunpack.c.h.b16 %v67
    %v330 = vunpack.c.l.b16 %v68
    %v331 = vunpack.c.h.b16 %v68
    %v332 = vunpack.c.l.b16 %v69
    %v333 = vunpack.c.h.b16 %v69
    %v334 = vunpack.c.l.b16 %v70
    %v335 = vunpack.c.h.b16 %v70
    %v336 = vunpack.c.l.b16 %v71
    %v337 = vunpack.c.h.b16 %v71
    %v338 = vunpack.c.l.b16 %v72
    %v339 = vunpack.c.h.b16 %v72
    %v340 = vunpack.c.l.b16 %v73
    %v341 = vunpack.c.h.b16 %v73
    %v342 = vunpack.c.l.b16 %v74
    %v343 = vunpack.c.h.b16 %v74
    %v344 = vunpack.c.l.b16 %v75
    %v345 = vunpack.c.h.b16 %v75
    %v346 = vunpack.c.l.b16 %v76
    %v347 = vunpack.c.h.b16 %v76
    %v348 = vpack.c.b16 %v288, %v284
    %v349 = vpack.c.b16 %v289, %v285
    %v350 = vpack.c.b16 %v290, %v286
    %v351 = vpack.c.b16 %v291, %v287
    %v352 = vpack.c.b16 %v296, %v292
    %v353 = vpack.c.b16 %v297, %v293
    %v354 = vpack.c.b16 %v298, %v294
    %v355 = vpack.c.b16 %v299, %v295
    %v356 = vpack.c.b16 %v304, %v300
    %v357 = vpack.c.b16 %v305, %v301
    %v358 = vpack.c.b16 %v306, %v302
    %v359 = vpack.c.b16 %v307, %v303
    %v360 = vpack.c.b16 %v312, %v308
    %v361 = vpack.c.b16 %v313, %v309
    %v362 = vpack.c.b16 %v314, %v310
    %v363 = vpack.c.b16 %v315, %v311
    %v364 = vpack.c.b16 %v320, %v316
    %v365 = vpack.c.b16 %v321, %v317
    %v366 = vpack.c.b16 %v322, %v318
    %v367 = vpack.c.b16 %v323, %v319
    %v368 = vpack.c.b16 %v328, %v324
    %v369 = vpack.c.b16 %v329, %v325
    %v370 = vpack.c.b16 %v330, %v326
    %v371 = vpack.c.b16 %v331, %v327
    %v372 = vpack.c.b16 %v336, %v332
    %v373 = vpack.c.b16 %v337, %v333
    %v374 = vpack.c.b16 %v338, %v334
    %v375 = vpack.c.b16 %v339, %v335
    %v376 = vpack.c.b16 %v344, %v340
    %v377 = vpack.c.b16 %v345, %v341
    %v378 = vpack.c.b16 %v346, %v342
    %v379 = vpack.c.b16 %v347, %v343
    %v416 = vrot.slane %v177, 2
    %v417 = vrot.slane %v179, 2
    %v418 = vrot.slane %v220, 2
    %v419 = vrot.slane %v222, 2
    %424 = vmatprep.subr.bf16.mxu0 %v349
    %425 = vmatpush1.bf16.msra.mxu0 %v348
    %426 = vmatprep.subr.bf16.mxu0 %v353
    %427 = vmatpush1.bf16.msra.mxu0 %v352
    %428 = vmatprep.subr.bf16.mxu0 %v357
    %429 = vmatpush1.bf16.msra.mxu0 %v356
    %430 = vmatprep.subr.bf16.mxu0 %v361
    %431 = vmatpush1.bf16.msra.mxu0 %v360
    %432 = vmatprep.subr.bf16.mxu0 %v365
    %433 = vmatpush1.bf16.msra.mxu0 %v364
    %434 = vmatprep.subr.bf16.mxu0 %v369
    %435 = vmatpush1.bf16.msra.mxu0 %v368
    %436 = vmatprep.subr.bf16.mxu0 %v373
    %437 = vmatpush1.bf16.msra.mxu0 %v372
    %438 = vmatprep.subr.bf16.mxu0 %v377
    %439 = vmatpush1.bf16.msra.mxu0 %v376
    %440 = vmatprep.subr.bf16.mxu0 0
    %441 = vmatpush1.bf16.msra.mxu0 0
    %442 = vmatprep.subr.bf16.mxu0 0
    %443 = vmatpush1.bf16.msra.mxu0 0
    %444 = vmatprep.subr.bf16.mxu0 0
    %445 = vmatpush1.bf16.msra.mxu0 0
    %446 = vmatprep.subr.bf16.mxu0 0
    %447 = vmatpush1.bf16.msra.mxu0 0
    %448 = vmatprep.subr.bf16.mxu0 0
    %449 = vmatpush1.bf16.msra.mxu0 0
    %450 = vmatprep.subr.bf16.mxu0 0
    %451 = vmatpush1.bf16.msra.mxu0 0
    %452 = vmatprep.subr.bf16.mxu0 0
    %453 = vmatpush1.bf16.msra.mxu0 0
    %454 = vmatprep.subr.bf16.mxu0 0
    %455 = vmatpush1.bf16.msra.mxu0 0
    %456 = vmatprep.mubr.bf16.mxu0 0
    %457 = vmatmul.mubr.bf16.gmra.mrb[0].mxu0 %v251
    %v458 = vpop.f32.mrb[0].mxu0
    %v459 = vadd.f32 %v416, %v458
    %v460 = vpop.f32.mrb[0].mxu0
    %v461 = vadd.f32 %v417, %v460
    %v462 = vpop.f32.mrb[0].mxu0
    %v463 = vpop.f32.mrb[0].mxu0
    %464 = vdwg.mxu0
    %465 = vmatprep.subr.bf16.mxu0 %v351
    %466 = vmatpush1.bf16.msra.mxu0 %v350
    %467 = vmatprep.subr.bf16.mxu0 %v355
    %468 = vmatpush1.bf16.msra.mxu0 %v354
    %469 = vmatprep.subr.bf16.mxu0 %v359
    %470 = vmatpush1.bf16.msra.mxu0 %v358
    %471 = vmatprep.subr.bf16.mxu0 %v363
    %472 = vmatpush1.bf16.msra.mxu0 %v362
    %473 = vmatprep.subr.bf16.mxu0 %v367
    %474 = vmatpush1.bf16.msra.mxu0 %v366
    %475 = vmatprep.subr.bf16.mxu0 %v371
    %476 = vmatpush1.bf16.msra.mxu0 %v370
    %477 = vmatprep.subr.bf16.mxu0 %v375
    %478 = vmatpush1.bf16.msra.mxu0 %v374
    %479 = vmatprep.subr.bf16.mxu0 %v379
    %480 = vmatpush1.bf16.msra.mxu0 %v378
    %481 = vmatprep.subr.bf16.mxu0 0
    %482 = vmatpush1.bf16.msra.mxu0 0
    %483 = vmatprep.subr.bf16.mxu0 0
    %484 = vmatpush1.bf16.msra.mxu0 0
    %485 = vmatprep.subr.bf16.mxu0 0
    %486 = vmatpush1.bf16.msra.mxu0 0
    %487 = vmatprep.subr.bf16.mxu0 0
    %488 = vmatpush1.bf16.msra.mxu0 0
    %489 = vmatprep.subr.bf16.mxu0 0
    %490 = vmatpush1.bf16.msra.mxu0 0
    %491 = vmatprep.subr.bf16.mxu0 0
    %492 = vmatpush1.bf16.msra.mxu0 0
    %493 = vmatprep.subr.bf16.mxu0 0
    %494 = vmatpush1.bf16.msra.mxu0 0
    %495 = vmatprep.subr.bf16.mxu0 0
    %496 = vmatpush1.bf16.msra.mxu0 0
    %497 = vmatprep.mubr.bf16.mxu0 0
    %498 = vmatmul.mubr.bf16.gmra.mrb[0].mxu0 %v251
    %v499 = vpop.f32.mrb[0].mxu0
    %v500 = vadd.f32 %v418, %v499
    %v501 = vpop.f32.mrb[0].mxu0
    %v502 = vadd.f32 %v419, %v501
    %v503 = vpop.f32.mrb[0].mxu0
    %v504 = vpop.f32.mrb[0].mxu0
    %505 = vdwg.mxu0
    %v506 = vxor.u32 %v459, 2147483648
    %v507 = vxor.u32 %v461, 2147483648
    %v508 = vxor.u32 %v500, 2147483648
    %v509 = vmul.f32 %v506, 1.442695
    %v510 = vpow.pop %v509
    %v511 = vmul.f32 %v507, 1.442695
    %v512 = vpow.pop %v511
    %v513 = vmul.f32 %v508, 1.442695
    %v514 = vpow.pop %v513
    %v515 = vadd.f32 %v510, 1.0
    %v516 = vadd.f32 %v512, 1.0
    %v517 = vadd.f32 %v514, 1.0
    %v518 = vrcp.pop %v515
    %v519 = vmul.f32 1.0, %v518
    %v520 = vrcp.pop %v516
    %v521 = vmul.f32 1.0, %v520
    %v522 = vrcp.pop %v517
    %v523 = vmul.f32 1.0, %v522
    %v524 = vtanh.pop %v502
    %v525 = vmul.f32 %v521, %v247
    %v526 = vmul.f32 %v519, %v524
    %v527 = vadd.f32 %v525, %v526
    %v528 = vtanh.pop %v527
    %v529 = vmul.f32 %v523, %v528
    %v530 = vpack.c.bf16 %v529, %v529
    %v531 = vrot.slane %v177, 4
    %v532 = vrot.slane %v179, 4
    %v533 = vrot.slane %v220, 4
    %v534 = vrot.slane %v222, 4
    %539 = vmatprep.subr.bf16.mxu0 %v349
    %540 = vmatpush1.bf16.msra.mxu0 %v348
    %541 = vmatprep.subr.bf16.mxu0 %v353
    %542 = vmatpush1.bf16.msra.mxu0 %v352
    %543 = vmatprep.subr.bf16.mxu0 %v357
    %544 = vmatpush1.bf16.msra.mxu0 %v356
    %545 = vmatprep.subr.bf16.mxu0 %v361
    %546 = vmatpush1.bf16.msra.mxu0 %v360
    %547 = vmatprep.subr.bf16.mxu0 %v365
    %548 = vmatpush1.bf16.msra.mxu0 %v364
    %549 = vmatprep.subr.bf16.mxu0 %v369
    %550 = vmatpush1.bf16.msra.mxu0 %v368
    %551 = vmatprep.subr.bf16.mxu0 %v373
    %552 = vmatpush1.bf16.msra.mxu0 %v372
    %553 = vmatprep.subr.bf16.mxu0 %v377
    %554 = vmatpush1.bf16.msra.mxu0 %v376
    %555 = vmatprep.subr.bf16.mxu0 0
    %556 = vmatpush1.bf16.msra.mxu0 0
    %557 = vmatprep.subr.bf16.mxu0 0
    %558 = vmatpush1.bf16.msra.mxu0 0
    %559 = vmatprep.subr.bf16.mxu0 0
    %560 = vmatpush1.bf16.msra.mxu0 0
    %561 = vmatprep.subr.bf16.mxu0 0
    %562 = vmatpush1.bf16.msra.mxu0 0
    %563 = vmatprep.subr.bf16.mxu0 0
    %564 = vmatpush1.bf16.msra.mxu0 0
    %565 = vmatprep.subr.bf16.mxu0 0
    %566 = vmatpush1.bf16.msra.mxu0 0
    %567 = vmatprep.subr.bf16.mxu0 0
    %568 = vmatpush1.bf16.msra.mxu0 0
    %569 = vmatprep.subr.bf16.mxu0 0
    %570 = vmatpush1.bf16.msra.mxu0 0
    %571 = vmatprep.mubr.bf16.mxu0 0
    %572 = vmatmul.mubr.bf16.gmra.mrb[0].mxu0 %v530
    %v573 = vpop.f32.mrb[0].mxu0
    %v574 = vadd.f32 %v531, %v573
    %v575 = vpop.f32.mrb[0].mxu0
    %v576 = vadd.f32 %v532, %v575
    %v577 = vpop.f32.mrb[0].mxu0
    %v578 = vpop.f32.mrb[0].mxu0
    %579 = vdwg.mxu0
    %580 = vmatprep.subr.bf16.mxu0 %v351
    %581 = vmatpush1.bf16.msra.mxu0 %v350
    %582 = vmatprep.subr.bf16.mxu0 %v355
    %583 = vmatpush1.bf16.msra.mxu0 %v354
    %584 = vmatprep.subr.bf16.mxu0 %v359
    %585 = vmatpush1.bf16.msra.mxu0 %v358
    %586 = vmatprep.subr.bf16.mxu0 %v363
    %587 = vmatpush1.bf16.msra.mxu0 %v362
    %588 = vmatprep.subr.bf16.mxu0 %v367
    %589 = vmatpush1.bf16.msra.mxu0 %v366
    %590 = vmatprep.subr.bf16.mxu0 %v371
    %591 = vmatpush1.bf16.msra.mxu0 %v370
    %592 = vmatprep.subr.bf16.mxu0 %v375
    %593 = vmatpush1.bf16.msra.mxu0 %v374
    %594 = vmatprep.subr.bf16.mxu0 %v379
    %595 = vmatpush1.bf16.msra.mxu0 %v378
    %596 = vmatprep.subr.bf16.mxu0 0
    %597 = vmatpush1.bf16.msra.mxu0 0
    %598 = vmatprep.subr.bf16.mxu0 0
    %599 = vmatpush1.bf16.msra.mxu0 0
    %600 = vmatprep.subr.bf16.mxu0 0
    %601 = vmatpush1.bf16.msra.mxu0 0
    %602 = vmatprep.subr.bf16.mxu0 0
    %603 = vmatpush1.bf16.msra.mxu0 0
    %604 = vmatprep.subr.bf16.mxu0 0
    %605 = vmatpush1.bf16.msra.mxu0 0
    %606 = vmatprep.subr.bf16.mxu0 0
    %607 = vmatpush1.bf16.msra.mxu0 0
    %608 = vmatprep.subr.bf16.mxu0 0
    %609 = vmatpush1.bf16.msra.mxu0 0
    %610 = vmatprep.subr.bf16.mxu0 0
    %611 = vmatpush1.bf16.msra.mxu0 0
    %612 = vmatprep.mubr.bf16.mxu0 0
    %613 = vmatmul.mubr.bf16.gmra.mrb[0].mxu0 %v530
    %v614 = vpop.f32.mrb[0].mxu0
    %v615 = vadd.f32 %v533, %v614
    %v616 = vpop.f32.mrb[0].mxu0
    %v617 = vadd.f32 %v534, %v616
    %v618 = vpop.f32.mrb[0].mxu0
    %v619 = vpop.f32.mrb[0].mxu0
    %620 = vdwg.mxu0
    %v621 = vxor.u32 %v574, 2147483648
    %v622 = vxor.u32 %v576, 2147483648
    %v623 = vxor.u32 %v615, 2147483648
    %v624 = vmul.f32 %v621, 1.442695
    %v625 = vpow.pop %v624
    %v626 = vmul.f32 %v622, 1.442695
    %v627 = vpow.pop %v626
    %v628 = vmul.f32 %v623, 1.442695
    %v629 = vpow.pop %v628
    %v630 = vadd.f32 %v625, 1.0
    %v631 = vadd.f32 %v627, 1.0
    %v632 = vadd.f32 %v629, 1.0
    %v633 = vrcp.pop %v630
    %v634 = vmul.f32 1.0, %v633
    %v635 = vrcp.pop %v631
    %v636 = vmul.f32 1.0, %v635
    %v637 = vrcp.pop %v632
    %v638 = vmul.f32 1.0, %v637
    %v639 = vtanh.pop %v617
    %v640 = vmul.f32 %v636, %v527
    %v641 = vmul.f32 %v634, %v639
    %v642 = vadd.f32 %v640, %v641
    %v643 = vtanh.pop %v642
    %v644 = vmul.f32 %v638, %v643
    %v645 = vpack.c.bf16 %v644, %v644
    %v646 = vrot.slane %v177, 6
    %v647 = vrot.slane %v179, 6
    %v648 = vrot.slane %v220, 6
    %v649 = vrot.slane %v222, 6
    %654 = vmatprep.subr.bf16.mxu0 %v349
    %655 = vmatpush1.bf16.msra.mxu0 %v348
    %656 = vmatprep.subr.bf16.mxu0 %v353
    %657 = vmatpush1.bf16.msra.mxu0 %v352
    %658 = vmatprep.subr.bf16.mxu0 %v357
    %659 = vmatpush1.bf16.msra.mxu0 %v356
    %660 = vmatprep.subr.bf16.mxu0 %v361
    %661 = vmatpush1.bf16.msra.mxu0 %v360
    %662 = vmatprep.subr.bf16.mxu0 %v365
    %663 = vmatpush1.bf16.msra.mxu0 %v364
    %664 = vmatprep.subr.bf16.mxu0 %v369
    %665 = vmatpush1.bf16.msra.mxu0 %v368
    %666 = vmatprep.subr.bf16.mxu0 %v373
    %667 = vmatpush1.bf16.msra.mxu0 %v372
    %668 = vmatprep.subr.bf16.mxu0 %v377
    %669 = vmatpush1.bf16.msra.mxu0 %v376
    %670 = vmatprep.subr.bf16.mxu0 0
    %671 = vmatpush1.bf16.msra.mxu0 0
    %672 = vmatprep.subr.bf16.mxu0 0
    %673 = vmatpush1.bf16.msra.mxu0 0
    %674 = vmatprep.subr.bf16.mxu0 0
    %675 = vmatpush1.bf16.msra.mxu0 0
    %676 = vmatprep.subr.bf16.mxu0 0
    %677 = vmatpush1.bf16.msra.mxu0 0
    %678 = vmatprep.subr.bf16.mxu0 0
    %679 = vmatpush1.bf16.msra.mxu0 0
    %680 = vmatprep.subr.bf16.mxu0 0
    %681 = vmatpush1.bf16.msra.mxu0 0
    %682 = vmatprep.subr.bf16.mxu0 0
    %683 = vmatpush1.bf16.msra.mxu0 0
    %684 = vmatprep.subr.bf16.mxu0 0
    %685 = vmatpush1.bf16.msra.mxu0 0
    %686 = vmatprep.mubr.bf16.mxu0 0
    %687 = vmatmul.mubr.bf16.gmra.mrb[0].mxu0 %v645
    %v688 = vpop.f32.mrb[0].mxu0
    %v689 = vadd.f32 %v646, %v688
    %v690 = vpop.f32.mrb[0].mxu0
    %v691 = vadd.f32 %v647, %v690
    %v692 = vpop.f32.mrb[0].mxu0
    %v693 = vpop.f32.mrb[0].mxu0
    %694 = vdwg.mxu0
    %695 = vmatprep.subr.bf16.mxu0 %v351
    %696 = vmatpush1.bf16.msra.mxu0 %v350
    %697 = vmatprep.subr.bf16.mxu0 %v355
    %698 = vmatpush1.bf16.msra.mxu0 %v354
    %699 = vmatprep.subr.bf16.mxu0 %v359
    %700 = vmatpush1.bf16.msra.mxu0 %v358
    %701 = vmatprep.subr.bf16.mxu0 %v363
    %702 = vmatpush1.bf16.msra.mxu0 %v362
    %703 = vmatprep.subr.bf16.mxu0 %v367
    %704 = vmatpush1.bf16.msra.mxu0 %v366
    %705 = vmatprep.subr.bf16.mxu0 %v371
    %706 = vmatpush1.bf16.msra.mxu0 %v370
    %707 = vmatprep.subr.bf16.mxu0 %v375
    %708 = vmatpush1.bf16.msra.mxu0 %v374
    %709 = vmatprep.subr.bf16.mxu0 %v379
    %710 = vmatpush1.bf16.msra.mxu0 %v378
    %711 = vmatprep.subr.bf16.mxu0 0
    %712 = vmatpush1.bf16.msra.mxu0 0
    %713 = vmatprep.subr.bf16.mxu0 0
    %714 = vmatpush1.bf16.msra.mxu0 0
    %715 = vmatprep.subr.bf16.mxu0 0
    %716 = vmatpush1.bf16.msra.mxu0 0
    %717 = vmatprep.subr.bf16.mxu0 0
    %718 = vmatpush1.bf16.msra.mxu0 0
    %719 = vmatprep.subr.bf16.mxu0 0
    %720 = vmatpush1.bf16.msra.mxu0 0
    %721 = vmatprep.subr.bf16.mxu0 0
    %722 = vmatpush1.bf16.msra.mxu0 0
    %723 = vmatprep.subr.bf16.mxu0 0
    %724 = vmatpush1.bf16.msra.mxu0 0
    %725 = vmatprep.subr.bf16.mxu0 0
    %726 = vmatpush1.bf16.msra.mxu0 0
    %727 = vmatprep.mubr.bf16.mxu0 0
    %728 = vmatmul.mubr.bf16.gmra.mrb[0].mxu0 %v645
    %v729 = vpop.f32.mrb[0].mxu0
    %v730 = vadd.f32 %v648, %v729
    %v731 = vpop.f32.mrb[0].mxu0
    %v732 = vadd.f32 %v649, %v731
    %v733 = vpop.f32.mrb[0].mxu0
    %v734 = vpop.f32.mrb[0].mxu0
    %735 = vdwg.mxu0
    %v736 = vxor.u32 %v689, 2147483648
    %v737 = vxor.u32 %v691, 2147483648
    %v738 = vxor.u32 %v730, 2147483648
    %v739 = vmul.f32 %v736, 1.442695
    %v740 = vpow.pop %v739
    %v741 = vmul.f32 %v737, 1.442695
    %v742 = vpow.pop %v741
    %v743 = vmul.f32 %v738, 1.442695
    %v744 = vpow.pop %v743
    %v745 = vadd.f32 %v740, 1.0
    %v746 = vadd.f32 %v742, 1.0
    %v747 = vadd.f32 %v744, 1.0
    %v748 = vrcp.pop %v745
    %v749 = vmul.f32 1.0, %v748
    %v750 = vrcp.pop %v746
    %v751 = vmul.f32 1.0, %v750
    %v752 = vrcp.pop %v747
    %v753 = vmul.f32 1.0, %v752
    %v754 = vtanh.pop %v732
    %v755 = vmul.f32 %v751, %v642
    %v756 = vmul.f32 %v749, %v754
    %v757 = vadd.f32 %v755, %v756
    %v758 = vtanh.pop %v757
    %v759 = vmul.f32 %v753, %v758
    %v760 = vpack.c.bf16 %v759, %v759
    %761 = vmatprep.subr.bf16.mxu0 %v349
    %762 = vmatpush1.bf16.msra.mxu0 %v348
    %763 = vmatprep.subr.bf16.mxu0 %v353
    %764 = vmatpush1.bf16.msra.mxu0 %v352
    %765 = vmatprep.subr.bf16.mxu0 %v357
    %766 = vmatpush1.bf16.msra.mxu0 %v356
    %767 = vmatprep.subr.bf16.mxu0 %v361
    %768 = vmatpush1.bf16.msra.mxu0 %v360
    %769 = vmatprep.subr.bf16.mxu0 %v365
    %770 = vmatpush1.bf16.msra.mxu0 %v364
    %771 = vmatprep.subr.bf16.mxu0 %v369
    %772 = vmatpush1.bf16.msra.mxu0 %v368
    %773 = vmatprep.subr.bf16.mxu0 %v373
    %774 = vmatpush1.bf16.msra.mxu0 %v372
    %775 = vmatprep.subr.bf16.mxu0 %v377
    %776 = vmatpush1.bf16.msra.mxu0 %v376
    %777 = vmatprep.subr.bf16.mxu0 0
    %778 = vmatpush1.bf16.msra.mxu0 0
    %779 = vmatprep.subr.bf16.mxu0 0
    %780 = vmatpush1.bf16.msra.mxu0 0
    %781 = vmatprep.subr.bf16.mxu0 0
    %782 = vmatpush1.bf16.msra.mxu0 0
    %783 = vmatprep.subr.bf16.mxu0 0
    %784 = vmatpush1.bf16.msra.mxu0 0
    %785 = vmatprep.subr.bf16.mxu0 0
    %786 = vmatpush1.bf16.msra.mxu0 0
    %787 = vmatprep.subr.bf16.mxu0 0
    %788 = vmatpush1.bf16.msra.mxu0 0
    %789 = vmatprep.subr.bf16.mxu0 0
    %790 = vmatpush1.bf16.msra.mxu0 0
    %791 = vmatprep.subr.bf16.mxu0 0
    %792 = vmatpush1.bf16.msra.mxu0 0
    %793 = vmatprep.mubr.bf16.mxu0 0
    %794 = vmatmul.mubr.bf16.gmra.mrb[0].mxu0 %v760
    %v795 = vpop.f32.mrb[0].mxu0
    %v796 = vadd.f32 %v181, %v795
    %v797 = vpop.f32.mrb[0].mxu0
    %v798 = vadd.f32 %v183, %v797
    %v799 = vpop.f32.mrb[0].mxu0
    %v800 = vpop.f32.mrb[0].mxu0
    %801 = vdwg.mxu0
    %802 = vmatprep.subr.bf16.mxu0 %v351
    %803 = vmatpush1.bf16.msra.mxu0 %v350
    %804 = vmatprep.subr.bf16.mxu0 %v355
    %805 = vmatpush1.bf16.msra.mxu0 %v354
    %806 = vmatprep.subr.bf16.mxu0 %v359
    %807 = vmatpush1.bf16.msra.mxu0 %v358
    %808 = vmatprep.subr.bf16.mxu0 %v363
    %809 = vmatpush1.bf16.msra.mxu0 %v362
    %810 = vmatprep.subr.bf16.mxu0 %v367
    %811 = vmatpush1.bf16.msra.mxu0 %v366
    %812 = vmatprep.subr.bf16.mxu0 %v371
    %813 = vmatpush1.bf16.msra.mxu0 %v370
    %814 = vmatprep.subr.bf16.mxu0 %v375
    %815 = vmatpush1.bf16.msra.mxu0 %v374
    %816 = vmatprep.subr.bf16.mxu0 %v379
    %817 = vmatpush1.bf16.msra.mxu0 %v378
    %818 = vmatprep.subr.bf16.mxu0 0
    %819 = vmatpush1.bf16.msra.mxu0 0
    %820 = vmatprep.subr.bf16.mxu0 0
    %821 = vmatpush1.bf16.msra.mxu0 0
    %822 = vmatprep.subr.bf16.mxu0 0
    %823 = vmatpush1.bf16.msra.mxu0 0
    %824 = vmatprep.subr.bf16.mxu0 0
    %825 = vmatpush1.bf16.msra.mxu0 0
    %826 = vmatprep.subr.bf16.mxu0 0
    %827 = vmatpush1.bf16.msra.mxu0 0
    %828 = vmatprep.subr.bf16.mxu0 0
    %829 = vmatpush1.bf16.msra.mxu0 0
    %830 = vmatprep.subr.bf16.mxu0 0
    %831 = vmatpush1.bf16.msra.mxu0 0
    %832 = vmatprep.subr.bf16.mxu0 0
    %833 = vmatpush1.bf16.msra.mxu0 0
    %834 = vmatprep.mubr.bf16.mxu0 0
    %835 = vmatmul.mubr.bf16.gmra.mrb[0].mxu0 %v760
    %v836 = vpop.f32.mrb[0].mxu0
    %v837 = vadd.f32 %v224, %v836
    %v838 = vpop.f32.mrb[0].mxu0
    %v839 = vadd.f32 %v226, %v838
    %v840 = vpop.f32.mrb[0].mxu0
    %v841 = vpop.f32.mrb[0].mxu0
    %842 = vdwg.mxu0
    %v843 = vxor.u32 %v796, 2147483648
    %v844 = vxor.u32 %v798, 2147483648
    %v845 = vxor.u32 %v837, 2147483648
    %v846 = vmul.f32 %v843, 1.442695
    %v847 = vpow.pop %v846
    %v848 = vmul.f32 %v844, 1.442695
    %v849 = vpow.pop %v848
    %v850 = vmul.f32 %v845, 1.442695
    %v851 = vpow.pop %v850
    %v852 = vadd.f32 %v847, 1.0
    %v853 = vadd.f32 %v849, 1.0
    %v854 = vadd.f32 %v851, 1.0
    %v855 = vrcp.pop %v852
    %v856 = vmul.f32 1.0, %v855
    %v857 = vrcp.pop %v853
    %v858 = vmul.f32 1.0, %v857
    %v859 = vrcp.pop %v854
    %v860 = vmul.f32 1.0, %v859
    %v861 = vtanh.pop %v839
    %v862 = vmul.f32 %v858, %v757
    %v863 = vmul.f32 %v856, %v861
    %v864 = vadd.f32 %v862, %v863
    %v865 = vtanh.pop %v864
    %v866 = vmul.f32 %v860, %v865
    %v867 = vpack.c.bf16 %v866, %v866
    %v872 = vrot.slane %v181, 2
    %v873 = vrot.slane %v183, 2
    %v874 = vrot.slane %v224, 2
    %v875 = vrot.slane %v226, 2
    %880 = vmatprep.subr.bf16.mxu0 %v349
    %881 = vmatpush1.bf16.msra.mxu0 %v348
    %882 = vmatprep.subr.bf16.mxu0 %v353
    %883 = vmatpush1.bf16.msra.mxu0 %v352
    %884 = vmatprep.subr.bf16.mxu0 %v357
    %885 = vmatpush1.bf16.msra.mxu0 %v356
    %886 = vmatprep.subr.bf16.mxu0 %v361
    %887 = vmatpush1.bf16.msra.mxu0 %v360
    %888 = vmatprep.subr.bf16.mxu0 %v365
    %889 = vmatpush1.bf16.msra.mxu0 %v364
    %890 = vmatprep.subr.bf16.mxu0 %v369
    %891 = vmatpush1.bf16.msra.mxu0 %v368
    %892 = vmatprep.subr.bf16.mxu0 %v373
    %893 = vmatpush1.bf16.msra.mxu0 %v372
    %894 = vmatprep.subr.bf16.mxu0 %v377
    %895 = vmatpush1.bf16.msra.mxu0 %v376
    %896 = vmatprep.subr.bf16.mxu0 0
    %897 = vmatpush1.bf16.msra.mxu0 0
    %898 = vmatprep.subr.bf16.mxu0 0
    %899 = vmatpush1.bf16.msra.mxu0 0
    %900 = vmatprep.subr.bf16.mxu0 0
    %901 = vmatpush1.bf16.msra.mxu0 0
    %902 = vmatprep.subr.bf16.mxu0 0
    %903 = vmatpush1.bf16.msra.mxu0 0
    %904 = vmatprep.subr.bf16.mxu0 0
    %905 = vmatpush1.bf16.msra.mxu0 0
    %906 = vmatprep.subr.bf16.mxu0 0
    %907 = vmatpush1.bf16.msra.mxu0 0
    %908 = vmatprep.subr.bf16.mxu0 0
    %909 = vmatpush1.bf16.msra.mxu0 0
    %910 = vmatprep.subr.bf16.mxu0 0
    %911 = vmatpush1.bf16.msra.mxu0 0
    %912 = vmatprep.mubr.bf16.mxu0 0
    %913 = vmatmul.mubr.bf16.gmra.mrb[0].mxu0 %v867
    %v914 = vpop.f32.mrb[0].mxu0
    %v915 = vadd.f32 %v872, %v914
    %v916 = vpop.f32.mrb[0].mxu0
    %v917 = vadd.f32 %v873, %v916
    %v918 = vpop.f32.mrb[0].mxu0
    %v919 = vpop.f32.mrb[0].mxu0
    %920 = vdwg.mxu0
    %921 = vmatprep.subr.bf16.mxu0 %v351
    %922 = vmatpush1.bf16.msra.mxu0 %v350
    %923 = vmatprep.subr.bf16.mxu0 %v355
    %924 = vmatpush1.bf16.msra.mxu0 %v354
    %925 = vmatprep.subr.bf16.mxu0 %v359
    %926 = vmatpush1.bf16.msra.mxu0 %v358
    %927 = vmatprep.subr.bf16.mxu0 %v363
    %928 = vmatpush1.bf16.msra.mxu0 %v362
    %929 = vmatprep.subr.bf16.mxu0 %v367
    %930 = vmatpush1.bf16.msra.mxu0 %v366
    %931 = vmatprep.subr.bf16.mxu0 %v371
    %932 = vmatpush1.bf16.msra.mxu0 %v370
    %933 = vmatprep.subr.bf16.mxu0 %v375
    %934 = vmatpush1.bf16.msra.mxu0 %v374
    %935 = vmatprep.subr.bf16.mxu0 %v379
    %936 = vmatpush1.bf16.msra.mxu0 %v378
    %937 = vmatprep.subr.bf16.mxu0 0
    %938 = vmatpush1.bf16.msra.mxu0 0
    %939 = vmatprep.subr.bf16.mxu0 0
    %940 = vmatpush1.bf16.msra.mxu0 0
    %941 = vmatprep.subr.bf16.mxu0 0
    %942 = vmatpush1.bf16.msra.mxu0 0
    %943 = vmatprep.subr.bf16.mxu0 0
    %944 = vmatpush1.bf16.msra.mxu0 0
    %945 = vmatprep.subr.bf16.mxu0 0
    %946 = vmatpush1.bf16.msra.mxu0 0
    %947 = vmatprep.subr.bf16.mxu0 0
    %948 = vmatpush1.bf16.msra.mxu0 0
    %949 = vmatprep.subr.bf16.mxu0 0
    %950 = vmatpush1.bf16.msra.mxu0 0
    %951 = vmatprep.subr.bf16.mxu0 0
    %952 = vmatpush1.bf16.msra.mxu0 0
    %953 = vmatprep.mubr.bf16.mxu0 0
    %954 = vmatmul.mubr.bf16.gmra.mrb[0].mxu0 %v867
    %v955 = vpop.f32.mrb[0].mxu0
    %v956 = vadd.f32 %v874, %v955
    %v957 = vpop.f32.mrb[0].mxu0
    %v958 = vadd.f32 %v875, %v957
    %v959 = vpop.f32.mrb[0].mxu0
    %v960 = vpop.f32.mrb[0].mxu0
    %961 = vdwg.mxu0
    %v962 = vxor.u32 %v915, 2147483648
    %v963 = vxor.u32 %v917, 2147483648
    %v964 = vxor.u32 %v956, 2147483648
    %v965 = vmul.f32 %v962, 1.442695
    %v966 = vpow.pop %v965
    %v967 = vmul.f32 %v963, 1.442695
    %v968 = vpow.pop %v967
    %v969 = vmul.f32 %v964, 1.442695
    %v970 = vpow.pop %v969
    %v971 = vadd.f32 %v966, 1.0
    %v972 = vadd.f32 %v968, 1.0
    %v973 = vadd.f32 %v970, 1.0
    %v974 = vrcp.pop %v971
    %v975 = vmul.f32 1.0, %v974
    %v976 = vrcp.pop %v972
    %v977 = vmul.f32 1.0, %v976
    %v978 = vrcp.pop %v973
    %v979 = vmul.f32 1.0, %v978
    %v980 = vtanh.pop %v958
    %v981 = vmul.f32 %v977, %v864
    %v982 = vmul.f32 %v975, %v980
    %v983 = vadd.f32 %v981, %v982
    %v984 = vtanh.pop %v983
    %v985 = vmul.f32 %v979, %v984
    %v986 = vpack.c.bf16 %v985, %v985
    %v987 = vrot.slane %v181, 4
    %v988 = vrot.slane %v183, 4
    %v989 = vrot.slane %v224, 4
    %v990 = vrot.slane %v226, 4
    %995 = vmatprep.subr.bf16.mxu0 %v349
    %996 = vmatpush1.bf16.msra.mxu0 %v348
    %997 = vmatprep.subr.bf16.mxu0 %v353
    %998 = vmatpush1.bf16.msra.mxu0 %v352
    %999 = vmatprep.subr.bf16.mxu0 %v357
    %1000 = vmatpush1.bf16.msra.mxu0 %v356
    %1001 = vmatprep.subr.bf16.mxu0 %v361
    %1002 = vmatpush1.bf16.msra.mxu0 %v360
    %1003 = vmatprep.subr.bf16.mxu0 %v365
    %1004 = vmatpush1.bf16.msra.mxu0 %v364
    %1005 = vmatprep.subr.bf16.mxu0 %v369
    %1006 = vmatpush1.bf16.msra.mxu0 %v368
    %1007 = vmatprep.subr.bf16.mxu0 %v373
    %1008 = vmatpush1.bf16.msra.mxu0 %v372
    %1009 = vmatprep.subr.bf16.mxu0 %v377
    %1010 = vmatpush1.bf16.msra.mxu0 %v376
    %1011 = vmatprep.subr.bf16.mxu0 0
    %1012 = vmatpush1.bf16.msra.mxu0 0
    %1013 = vmatprep.subr.bf16.mxu0 0
    %1014 = vmatpush1.bf16.msra.mxu0 0
    %1015 = vmatprep.subr.bf16.mxu0 0
    %1016 = vmatpush1.bf16.msra.mxu0 0
    %1017 = vmatprep.subr.bf16.mxu0 0
    %1018 = vmatpush1.bf16.msra.mxu0 0
    %1019 = vmatprep.subr.bf16.mxu0 0
    %1020 = vmatpush1.bf16.msra.mxu0 0
    %1021 = vmatprep.subr.bf16.mxu0 0
    %1022 = vmatpush1.bf16.msra.mxu0 0
    %1023 = vmatprep.subr.bf16.mxu0 0
    %1024 = vmatpush1.bf16.msra.mxu0 0
    %1025 = vmatprep.subr.bf16.mxu0 0
    %1026 = vmatpush1.bf16.msra.mxu0 0
    %1027 = vmatprep.mubr.bf16.mxu0 0
    %1028 = vmatmul.mubr.bf16.gmra.mrb[0].mxu0 %v986
    %v1029 = vpop.f32.mrb[0].mxu0
    %v1030 = vadd.f32 %v987, %v1029
    %v1031 = vpop.f32.mrb[0].mxu0
    %v1032 = vadd.f32 %v988, %v1031
    %v1033 = vpop.f32.mrb[0].mxu0
    %v1034 = vpop.f32.mrb[0].mxu0
    %1035 = vdwg.mxu0
    %1036 = vmatprep.subr.bf16.mxu0 %v351
    %1037 = vmatpush1.bf16.msra.mxu0 %v350
    %1038 = vmatprep.subr.bf16.mxu0 %v355
    %1039 = vmatpush1.bf16.msra.mxu0 %v354
    %1040 = vmatprep.subr.bf16.mxu0 %v359
    %1041 = vmatpush1.bf16.msra.mxu0 %v358
    %1042 = vmatprep.subr.bf16.mxu0 %v363
    %1043 = vmatpush1.bf16.msra.mxu0 %v362
    %1044 = vmatprep.subr.bf16.mxu0 %v367
    %1045 = vmatpush1.bf16.msra.mxu0 %v366
    %1046 = vmatprep.subr.bf16.mxu0 %v371
    %1047 = vmatpush1.bf16.msra.mxu0 %v370
    %1048 = vmatprep.subr.bf16.mxu0 %v375
    %1049 = vmatpush1.bf16.msra.mxu0 %v374
    %1050 = vmatprep.subr.bf16.mxu0 %v379
    %1051 = vmatpush1.bf16.msra.mxu0 %v378
    %1052 = vmatprep.subr.bf16.mxu0 0
    %1053 = vmatpush1.bf16.msra.mxu0 0
    %1054 = vmatprep.subr.bf16.mxu0 0
    %1055 = vmatpush1.bf16.msra.mxu0 0
    %1056 = vmatprep.subr.bf16.mxu0 0
    %1057 = vmatpush1.bf16.msra.mxu0 0
    %1058 = vmatprep.subr.bf16.mxu0 0
    %1059 = vmatpush1.bf16.msra.mxu0 0
    %1060 = vmatprep.subr.bf16.mxu0 0
    %1061 = vmatpush1.bf16.msra.mxu0 0
    %1062 = vmatprep.subr.bf16.mxu0 0
    %1063 = vmatpush1.bf16.msra.mxu0 0
    %1064 = vmatprep.subr.bf16.mxu0 0
    %1065 = vmatpush1.bf16.msra.mxu0 0
    %1066 = vmatprep.subr.bf16.mxu0 0
    %1067 = vmatpush1.bf16.msra.mxu0 0
    %1068 = vmatprep.mubr.bf16.mxu0 0
    %1069 = vmatmul.mubr.bf16.gmra.mrb[0].mxu0 %v986
    %v1070 = vpop.f32.mrb[0].mxu0
    %v1071 = vadd.f32 %v989, %v1070
    %v1072 = vpop.f32.mrb[0].mxu0
    %v1073 = vadd.f32 %v990, %v1072
    %v1074 = vpop.f32.mrb[0].mxu0
    %v1075 = vpop.f32.mrb[0].mxu0
    %1076 = vdwg.mxu0
    %v1077 = vxor.u32 %v1030, 2147483648
    %v1078 = vxor.u32 %v1032, 2147483648
    %v1079 = vxor.u32 %v1071, 2147483648
    %v1080 = vmul.f32 %v1077, 1.442695
    %v1081 = vpow.pop %v1080
    %v1082 = vmul.f32 %v1078, 1.442695
    %v1083 = vpow.pop %v1082
    %v1084 = vmul.f32 %v1079, 1.442695
    %v1085 = vpow.pop %v1084
    %v1086 = vadd.f32 %v1081, 1.0
    %v1087 = vadd.f32 %v1083, 1.0
    %v1088 = vadd.f32 %v1085, 1.0
    %v1089 = vrcp.pop %v1086
    %v1090 = vmul.f32 1.0, %v1089
    %v1091 = vrcp.pop %v1087
    %v1092 = vmul.f32 1.0, %v1091
    %v1093 = vrcp.pop %v1088
    %v1094 = vmul.f32 1.0, %v1093
    %v1095 = vtanh.pop %v1073
    %v1096 = vmul.f32 %v1092, %v983
    %v1097 = vmul.f32 %v1090, %v1095
    %v1098 = vadd.f32 %v1096, %v1097
    %v1099 = vtanh.pop %v1098
    %v1100 = vmul.f32 %v1094, %v1099
    %v1101 = vpack.c.bf16 %v1100, %v1100
    %v1102 = vrot.slane %v181, 6
    %v1103 = vrot.slane %v183, 6
    %v1104 = vrot.slane %v224, 6
    %v1105 = vrot.slane %v226, 6
    %1110 = vmatprep.subr.bf16.mxu0 %v349
    %1111 = vmatpush1.bf16.msra.mxu0 %v348
    %1112 = vmatprep.subr.bf16.mxu0 %v353
    %1113 = vmatpush1.bf16.msra.mxu0 %v352
    %1114 = vmatprep.subr.bf16.mxu0 %v357
    %1115 = vmatpush1.bf16.msra.mxu0 %v356
    %1116 = vmatprep.subr.bf16.mxu0 %v361
    %1117 = vmatpush1.bf16.msra.mxu0 %v360
    %1118 = vmatprep.subr.bf16.mxu0 %v365
    %1119 = vmatpush1.bf16.msra.mxu0 %v364
    %1120 = vmatprep.subr.bf16.mxu0 %v369
    %1121 = vmatpush1.bf16.msra.mxu0 %v368
    %1122 = vmatprep.subr.bf16.mxu0 %v373
    %1123 = vmatpush1.bf16.msra.mxu0 %v372
    %1124 = vmatprep.subr.bf16.mxu0 %v377
    %1125 = vmatpush1.bf16.msra.mxu0 %v376
    %1126 = vmatprep.subr.bf16.mxu0 0
    %1127 = vmatpush1.bf16.msra.mxu0 0
    %1128 = vmatprep.subr.bf16.mxu0 0
    %1129 = vmatpush1.bf16.msra.mxu0 0
    %1130 = vmatprep.subr.bf16.mxu0 0
    %1131 = vmatpush1.bf16.msra.mxu0 0
    %1132 = vmatprep.subr.bf16.mxu0 0
    %1133 = vmatpush1.bf16.msra.mxu0 0
    %1134 = vmatprep.subr.bf16.mxu0 0
    %1135 = vmatpush1.bf16.msra.mxu0 0
    %1136 = vmatprep.subr.bf16.mxu0 0
    %1137 = vmatpush1.bf16.msra.mxu0 0
    %1138 = vmatprep.subr.bf16.mxu0 0
    %1139 = vmatpush1.bf16.msra.mxu0 0
    %1140 = vmatprep.subr.bf16.mxu0 0
    %1141 = vmatpush1.bf16.msra.mxu0 0
    %1142 = vmatprep.mubr.bf16.mxu0 0
    %1143 = vmatmul.mubr.bf16.gmra.mrb[0].mxu0 %v1101
    %v1144 = vpop.f32.mrb[0].mxu0
    %v1145 = vadd.f32 %v1102, %v1144
    %v1146 = vpop.f32.mrb[0].mxu0
    %v1147 = vadd.f32 %v1103, %v1146
    %v1148 = vpop.f32.mrb[0].mxu0
    %v1149 = vpop.f32.mrb[0].mxu0
    %1150 = vdwg.mxu0
    %1151 = vmatprep.subr.bf16.mxu0 %v351
    %1152 = vmatpush1.bf16.msra.mxu0 %v350
    %1153 = vmatprep.subr.bf16.mxu0 %v355
    %1154 = vmatpush1.bf16.msra.mxu0 %v354
    %1155 = vmatprep.subr.bf16.mxu0 %v359
    %1156 = vmatpush1.bf16.msra.mxu0 %v358
    %1157 = vmatprep.subr.bf16.mxu0 %v363
    %1158 = vmatpush1.bf16.msra.mxu0 %v362
    %1159 = vmatprep.subr.bf16.mxu0 %v367
    %1160 = vmatpush1.bf16.msra.mxu0 %v366
    %1161 = vmatprep.subr.bf16.mxu0 %v371
    %1162 = vmatpush1.bf16.msra.mxu0 %v370
    %1163 = vmatprep.subr.bf16.mxu0 %v375
    %1164 = vmatpush1.bf16.msra.mxu0 %v374
    %1165 = vmatprep.subr.bf16.mxu0 %v379
    %1166 = vmatpush1.bf16.msra.mxu0 %v378
    %1167 = vmatprep.subr.bf16.mxu0 0
    %1168 = vmatpush1.bf16.msra.mxu0 0
    %1169 = vmatprep.subr.bf16.mxu0 0
    %1170 = vmatpush1.bf16.msra.mxu0 0
    %1171 = vmatprep.subr.bf16.mxu0 0
    %1172 = vmatpush1.bf16.msra.mxu0 0
    %1173 = vmatprep.subr.bf16.mxu0 0
    %1174 = vmatpush1.bf16.msra.mxu0 0
    %1175 = vmatprep.subr.bf16.mxu0 0
    %1176 = vmatpush1.bf16.msra.mxu0 0
    %1177 = vmatprep.subr.bf16.mxu0 0
    %1178 = vmatpush1.bf16.msra.mxu0 0
    %1179 = vmatprep.subr.bf16.mxu0 0
    %1180 = vmatpush1.bf16.msra.mxu0 0
    %1181 = vmatprep.subr.bf16.mxu0 0
    %1182 = vmatpush1.bf16.msra.mxu0 0
    %1183 = vmatprep.mubr.bf16.mxu0 0
    %1184 = vmatmul.mubr.bf16.gmra.mrb[0].mxu0 %v1101
    %v1185 = vpop.f32.mrb[0].mxu0
    %v1186 = vadd.f32 %v1104, %v1185
    %v1187 = vpop.f32.mrb[0].mxu0
    %v1188 = vadd.f32 %v1105, %v1187
    %v1189 = vpop.f32.mrb[0].mxu0
    %v1190 = vpop.f32.mrb[0].mxu0
    %1191 = vdwg.mxu0
    %v1192 = vxor.u32 %v1145, 2147483648
    %v1193 = vxor.u32 %v1147, 2147483648
    %v1194 = vxor.u32 %v1186, 2147483648
    %v1195 = vmul.f32 %v1192, 1.442695
    %v1196 = vpow.pop %v1195
    %v1197 = vmul.f32 %v1193, 1.442695
    %v1198 = vpow.pop %v1197
    %v1199 = vmul.f32 %v1194, 1.442695
    %v1200 = vpow.pop %v1199
    %v1201 = vadd.f32 %v1196, 1.0
    %v1202 = vadd.f32 %v1198, 1.0
    %v1203 = vadd.f32 %v1200, 1.0
    %v1204 = vrcp.pop %v1201
    %v1205 = vmul.f32 1.0, %v1204
    %v1206 = vrcp.pop %v1202
    %v1207 = vmul.f32 1.0, %v1206
    %v1208 = vrcp.pop %v1203
    %v1209 = vmul.f32 1.0, %v1208
    %v1210 = vtanh.pop %v1188
    %v1211 = vmul.f32 %v1207, %v1098
    %v1212 = vmul.f32 %v1205, %v1210
    %v1213 = vadd.f32 %v1211, %v1212
    %v1214 = vtanh.pop %v1213
    %v1215 = vmul.f32 %v1209, %v1214
    %v1216 = vpack.c.bf16 %v1215, %v1215
    %1217 = vmatprep.subr.bf16.mxu0 %v349
    %1218 = vmatpush1.bf16.msra.mxu0 %v348
    %1219 = vmatprep.subr.bf16.mxu0 %v353
    %1220 = vmatpush1.bf16.msra.mxu0 %v352
    %1221 = vmatprep.subr.bf16.mxu0 %v357
    %1222 = vmatpush1.bf16.msra.mxu0 %v356
    %1223 = vmatprep.subr.bf16.mxu0 %v361
    %1224 = vmatpush1.bf16.msra.mxu0 %v360
    %1225 = vmatprep.subr.bf16.mxu0 %v365
    %1226 = vmatpush1.bf16.msra.mxu0 %v364
    %1227 = vmatprep.subr.bf16.mxu0 %v369
    %1228 = vmatpush1.bf16.msra.mxu0 %v368
    %1229 = vmatprep.subr.bf16.mxu0 %v373
    %1230 = vmatpush1.bf16.msra.mxu0 %v372
    %1231 = vmatprep.subr.bf16.mxu0 %v377
    %1232 = vmatpush1.bf16.msra.mxu0 %v376
    %1233 = vmatprep.subr.bf16.mxu0 0
    %1234 = vmatpush1.bf16.msra.mxu0 0
    %1235 = vmatprep.subr.bf16.mxu0 0
    %1236 = vmatpush1.bf16.msra.mxu0 0
    %1237 = vmatprep.subr.bf16.mxu0 0
    %1238 = vmatpush1.bf16.msra.mxu0 0
    %1239 = vmatprep.subr.bf16.mxu0 0
    %1240 = vmatpush1.bf16.msra.mxu0 0
    %1241 = vmatprep.subr.bf16.mxu0 0
    %1242 = vmatpush1.bf16.msra.mxu0 0
    %1243 = vmatprep.subr.bf16.mxu0 0
    %1244 = vmatpush1.bf16.msra.mxu0 0
    %1245 = vmatprep.subr.bf16.mxu0 0
    %1246 = vmatpush1.bf16.msra.mxu0 0
    %1247 = vmatprep.subr.bf16.mxu0 0
    %1248 = vmatpush1.bf16.msra.mxu0 0
    %1249 = vmatprep.mubr.bf16.mxu0 0
    %1250 = vmatmul.mubr.bf16.gmra.mrb[0].mxu0 %v1216
    %v1251 = vpop.f32.mrb[0].mxu0
    %v1252 = vadd.f32 %v85, %v1251
    %v1253 = vpop.f32.mrb[0].mxu0
    %v1254 = vadd.f32 %v89, %v1253
    %v1255 = vpop.f32.mrb[0].mxu0
    %v1256 = vpop.f32.mrb[0].mxu0
    %1257 = vdwg.mxu0
    %1258 = vmatprep.subr.bf16.mxu0 %v351
    %1259 = vmatpush1.bf16.msra.mxu0 %v350
    %1260 = vmatprep.subr.bf16.mxu0 %v355
    %1261 = vmatpush1.bf16.msra.mxu0 %v354
    %1262 = vmatprep.subr.bf16.mxu0 %v359
    %1263 = vmatpush1.bf16.msra.mxu0 %v358
    %1264 = vmatprep.subr.bf16.mxu0 %v363
    %1265 = vmatpush1.bf16.msra.mxu0 %v362
    %1266 = vmatprep.subr.bf16.mxu0 %v367
    %1267 = vmatpush1.bf16.msra.mxu0 %v366
    %1268 = vmatprep.subr.bf16.mxu0 %v371
    %1269 = vmatpush1.bf16.msra.mxu0 %v370
    %1270 = vmatprep.subr.bf16.mxu0 %v375
    %1271 = vmatpush1.bf16.msra.mxu0 %v374
    %1272 = vmatprep.subr.bf16.mxu0 %v379
    %1273 = vmatpush1.bf16.msra.mxu0 %v378
    %1274 = vmatprep.subr.bf16.mxu0 0
    %1275 = vmatpush1.bf16.msra.mxu0 0
    %1276 = vmatprep.subr.bf16.mxu0 0
    %1277 = vmatpush1.bf16.msra.mxu0 0
    %1278 = vmatprep.subr.bf16.mxu0 0
    %1279 = vmatpush1.bf16.msra.mxu0 0
    %1280 = vmatprep.subr.bf16.mxu0 0
    %1281 = vmatpush1.bf16.msra.mxu0 0
    %1282 = vmatprep.subr.bf16.mxu0 0
    %1283 = vmatpush1.bf16.msra.mxu0 0
    %1284 = vmatprep.subr.bf16.mxu0 0
    %1285 = vmatpush1.bf16.msra.mxu0 0
    %1286 = vmatprep.subr.bf16.mxu0 0
    %1287 = vmatpush1.bf16.msra.mxu0 0
    %1288 = vmatprep.subr.bf16.mxu0 0
    %1289 = vmatpush1.bf16.msra.mxu0 0
    %1290 = vmatprep.mubr.bf16.mxu0 0
    %1291 = vmatmul.mubr.bf16.gmra.mrb[0].mxu0 %v1216
    %v1292 = vpop.f32.mrb[0].mxu0
    %v1293 = vadd.f32 %v93, %v1292
    %v1294 = vpop.f32.mrb[0].mxu0
    %v1295 = vadd.f32 %v97, %v1294
    %v1296 = vpop.f32.mrb[0].mxu0
    %v1297 = vpop.f32.mrb[0].mxu0
    %1298 = vdwg.mxu0
    %v1299 = vxor.u32 %v1252, 2147483648
    %v1300 = vxor.u32 %v1254, 2147483648
    %v1301 = vxor.u32 %v1293, 2147483648
    %v1302 = vmul.f32 %v1299, 1.442695
    %v1303 = vpow.pop %v1302
    %v1304 = vmul.f32 %v1300, 1.442695
    %v1305 = vpow.pop %v1304
    %v1306 = vmul.f32 %v1301, 1.442695
    %v1307 = vpow.pop %v1306
    %v1308 = vadd.f32 %v1303, 1.0
    %v1309 = vadd.f32 %v1305, 1.0
    %v1310 = vadd.f32 %v1307, 1.0
    %v1311 = vrcp.pop %v1308
    %v1312 = vmul.f32 1.0, %v1311
    %v1313 = vrcp.pop %v1309
    %v1314 = vmul.f32 1.0, %v1313
    %v1315 = vrcp.pop %v1310
    %v1316 = vmul.f32 1.0, %v1315
    %v1317 = vtanh.pop %v1295
    %v1318 = vmul.f32 %v1314, %v1213
    %v1319 = vmul.f32 %v1312, %v1317
    %v1320 = vadd.f32 %v1318, %v1319
    %v1321 = vtanh.pop %v1320
    %v1322 = vmul.f32 %v1316, %v1321
    %v1323 = vld [vmem:[%s4] sm:$0x1]
    %v1325 = vlaneseq
    %v1326 = vshrl.u32 %v1325, 7
    %v1327 = vsub.s32 0, %v1326
    %v1328 = vrot.slane %v1323, %v1327
    %v1330 = vmul.f32 %v1322, %v1328
    %v1331 = vsel %vm129, %v1330, 0.0
    %1332 = vadd.xlane.f32.xlu0 %v1331
    %v1333 = vpop.xlane.xlu0 %1332
    %v1334 = vld [vmem:[#allocation2] sm:$0x1]
    %v1336 = vlaneseq
    %v1337 = vshrl.u32 %v1336, 7
    %v1338 = vsub.s32 0, %v1337
    %v1339 = vrot.slane %v1334, %v1338
    %v1341 = vadd.f32 %v1333, %v1339
    %v1342 = vxor.u32 %v1341, 2147483648
    %v1343 = vmul.f32 %v1342, 1.442695
    %v1344 = vpow.pop %v1343
    %v1345 = vadd.f32 %v1344, 1.0
    %v1346 = vrcp.pop %v1345
    %v1347 = vmul.f32 1.0, %v1346
    %vm1348 = vcmask 1024
    %1349 = vst.msk [vmem:[%s6] sm:$0x3] %vm1348, %v1347
    %v1350 = vsel %vm230, %v1215, %v1322
    %1351 = vst [vmem:[#allocation6] sm:$0x3] %v1350
    %v1352 = vsel %vm230, %v1213, %v1320
    %1353 = vst [vmem:[#allocation7] sm:$0x3] %v1352
    // Predicated region
    $region30: #{tpu_custom_call.1} parent=1 // pred_check
      _
    $region31: #{tpu_custom_call.1} parent=1 // pred_check_branch
      %1355 = sbr.rel (0) target = $region33
    $region32: #{tpu_custom_call.1} parent=1 // pred_region
      _
    $region33: #{tpu_custom_call.1} parent=1 // pred_fallthru
      _
    // Predicated region
    $region34: #{tpu_custom_call.1} parent=1 // pred_check
      _
    $region35: #{tpu_custom_call.1} parent=1 // pred_check_branch
      %1357 = sbr.rel (0) target = $region37
    $region36: #{tpu_custom_call.1} parent=1 // pred_region
      %s1359 = ssub.s32 32, 32
      %1360 = vsyncadd [#allocation5], %s1359
      %s1362 = sshll.u32 [#allocation6], 4
      %s1363 = int_to_ptr.vmem [resolvable:$true] %s1362
      %1365 = dma.vmem_to_hbm [thread:$0]  %s1363, 32, %s7, [#allocation5]
    $region37: #{tpu_custom_call.1} parent=1 // pred_fallthru
      _
    // Predicated region
    $region38: #{tpu_custom_call.1} parent=1 // pred_check
      _
    $region39: #{tpu_custom_call.1} parent=1 // pred_check_branch
      %1367 = sbr.rel (0) target = $region41
    $region40: #{tpu_custom_call.1} parent=1 // pred_region
      %s1369 = ssub.s32 32, 32
      %1370 = vsyncadd [#allocation8], %s1369
      %s1372 = sshll.u32 [#allocation7], 4
      %s1373 = int_to_ptr.vmem [resolvable:$true] %s1372
      %1375 = dma.vmem_to_hbm [thread:$0]  %s1373, 32, %s8, [#allocation8]
    $region41: #{tpu_custom_call.1} parent=1 // pred_fallthru
      _
    // Predicated region
    $region42: #{tpu_custom_call.1} parent=1 // pred_check
      _
    $region43: #{tpu_custom_call.1} parent=1 // pred_check_branch
      %1377 = sbr.rel (0) target = $region45
    $region44: #{tpu_custom_call.1} parent=1 // pred_region
      _
    $region45: #{tpu_custom_call.1} parent=1 // pred_fallthru
      _
    // Predicated region
    $region46: #{tpu_custom_call.1} parent=1 // pred_check
      _
    $region47: #{tpu_custom_call.1} parent=1 // pred_check_branch
      %1379 = sbr.rel (0) target = $region49
    $region48: #{tpu_custom_call.1} parent=1 // pred_region
      %1380 = dma.done [#allocation5], 32
    $region49: #{tpu_custom_call.1} parent=1 // pred_fallthru
      _
    // Predicated region
    $region50: #{tpu_custom_call.1} parent=1 // pred_check
      _
    $region51: #{tpu_custom_call.1} parent=1 // pred_check_branch
      %1382 = sbr.rel (0) target = $region53
    $region52: #{tpu_custom_call.1} parent=1 // pred_region
      %1383 = dma.done [#allocation8], 32
    $region53: #{tpu_custom_call.1} parent=1 // pred_fallthru
      _
    %1384 = vsyncpa [#allocation4], 1
    %1385 = vsyncpa [#allocation5], 1
    %1386 = vsyncpa [#allocation8], 1

</llo_original>
